<compile_context>
chip_gen: v7x
topology: tpu7x:2x2x1
jax: 0.10.0
libtpu: 0.0.40
codegen_flags: <defaults>
</compile_context>

<pallas_src>
import functools

import jax
import jax.numpy as jnp
from jax.experimental import pallas as pl
from jax.experimental.pallas import tpu as pltpu

NEG_INF = -1e30


def _round_up(x, m):
    return ((x + m - 1) // m) * m


def _layer_norm(x, gamma, beta, eps=1e-5):
    mu = jnp.mean(x, axis=-1, keepdims=True)
    var = jnp.mean((x - mu) ** 2, axis=-1, keepdims=True)
    return (x - mu) * jax.lax.rsqrt(var + eps) * gamma + beta


def concept_generator_kernel(
    outs_ref, snt_ref, pad_ref, cseq_ref, tgt_ref, wgt_ref, bgt_ref,
    wq_ref, bq_ref, wk_ref, bk_ref, wv_ref, bv_ref, wo_ref, bo_ref,
    g1_ref, be1_ref, w1_ref, b1_ref, w2_ref, b2_ref, g2_ref, be2_ref,
    wt_ref, bt_ref, wdg_ref, bdg_ref,
    outs_out_ref, loss_out_ref,
    *, scaling, vpad, pad_idx):
    f32 = jnp.float32

    x_in = outs_ref[...]                               # (Bb, T, D)
    snt = snt_ref[...]                                 # (Bb, S, D)
    pad = pad_ref[...]                                 # (Bb, 1, S) 1.0 at padded keys
    Bb, T, D = x_in.shape
    S = snt.shape[1]

    x2d = x_in.reshape(Bb * T, D)                      # fold batch rows for dense ops
    snt2d = snt.reshape(Bb * S, D)

    # ---- single-head alignment MultiheadAttention ----
    q = (jnp.dot(x2d, wq_ref[...], preferred_element_type=f32) + bq_ref[...]) * scaling
    k = jnp.dot(snt2d, wk_ref[...], preferred_element_type=f32) + bk_ref[...]
    v = jnp.dot(snt2d, wv_ref[...], preferred_element_type=f32) + bv_ref[...]
    q3 = q.reshape(Bb, T, D)
    k3 = k.reshape(Bb, S, D)
    v3 = v.reshape(Bb, S, D)

    scores = jnp.einsum('btd,bsd->bts', q3, k3, preferred_element_type=f32)
    scores = jnp.where(pad > 0.5, NEG_INF, scores)
    scores = scores - jnp.max(scores, axis=-1, keepdims=True)
    es = jnp.exp(scores)
    attn_w = es * pl.reciprocal(jnp.sum(es, axis=-1, keepdims=True),
                                approx=True)           # (Bb, T, S) = alignment weights
    attn = jnp.einsum('bts,bsd->btd', attn_w, v3, preferred_element_type=f32)

    x = jnp.dot(attn.reshape(Bb * T, D), wo_ref[...],
                preferred_element_type=f32) + bo_ref[...]

    # ---- residual + layer norm + FFN + layer norm ----
    x = _layer_norm(x2d + x, g1_ref[...], be1_ref[...])
    residual = x
    h = jnp.maximum(jnp.dot(x, w1_ref[...], preferred_element_type=f32) + b1_ref[...], 0.0)
    x2 = jnp.dot(h, w2_ref[...], preferred_element_type=f32) + b2_ref[...]
    outs2 = _layer_norm(residual + x2, g2_ref[...], be2_ref[...])       # (Bb*T, D)
    outs_out_ref[...] = outs2.reshape(Bb, T, D).astype(outs_out_ref.dtype)

    # ---- concept head: fused [generator | diverter] matmul ----
    oc = jnp.tanh(jnp.dot(outs2, wt_ref[...], preferred_element_type=f32) + bt_ref[...])
    C = oc.shape[-1]
    logits = jnp.dot(oc, wdg_ref[...], preferred_element_type=f32) + bdg_ref[...]
    glog = logits[:, :vpad]                            # generator logits (padded cols @ -1e30)
    dlog = logits[:, vpad:]                            # diverter logits (padded cols @ -1e30)

    # decision gates (softmax over the 3 real columns)
    dlog = dlog - jnp.max(dlog, axis=-1, keepdims=True)
    de = jnp.exp(dlog)
    dsm = de * pl.reciprocal(jnp.sum(de, axis=-1, keepdims=True), approx=True)
    gen_gate = dsm[:, 0:1].reshape(Bb, T, 1)
    map_gate = dsm[:, 1:2].reshape(Bb, T, 1)
    copy_gate = dsm[:, 2:3].reshape(Bb, T, 1)

    # generator softmax statistics (full matmul kept only for max / denominator)
    gmax = jnp.max(glog, axis=-1, keepdims=True)                       # (Bb*T, 1)
    inv_gdenom = pl.reciprocal(jnp.sum(jnp.exp(glog - gmax), axis=-1, keepdims=True),
                               approx=True)

    # generator probability at the target column (gathered wg columns; out-of-vocab
    # targets arrive with weight 0 / bias -1e30 -> zero generator mass).
    glog_tgt = (jnp.sum(oc.reshape(Bb, T, C) * wgt_ref[...], axis=-1, keepdims=True)
                + bgt_ref[...])                                        # (Bb, T, 1)
    gen_at_tgt = (gen_gate * jnp.exp(glog_tgt - gmax.reshape(Bb, T, 1))
                  * inv_gdenom.reshape(Bb, T, 1))

    # copy/map mass landing on the target column: scatter_add_ realized as masked
    # reductions over source positions (duplicate ids accumulate, like scatter_add_).
    cseq = cseq_ref[...]                                               # (Bb, 2, S) int32
    tgt = tgt_ref[...]                                                 # (Bb, T, 1) int32
    m0 = (cseq[:, 0:1, :] == tgt).astype(f32)                          # (Bb, T, S)
    m1 = (cseq[:, 1:2, :] == tgt).astype(f32)
    copy_at_tgt = (copy_gate * jnp.sum(attn_w * m0, axis=-1, keepdims=True)
                   + map_gate * jnp.sum(attn_w * m1, axis=-1, keepdims=True))

    prob_tgt = gen_at_tgt + copy_at_tgt                                # (Bb, T, 1)
    valid = (tgt != pad_idx).astype(f32)
    nll = -jnp.log(prob_tgt + 1e-12) * valid
    loss_out_ref[...] = jnp.sum(nll, axis=1, keepdims=True)            # (Bb, 1, 1)


def make_params(key, D, FF, C, V):
    ks = jax.random.split(key, 12)
    n = lambda k, s, std: jax.random.normal(k, s, jnp.float32) * std
    p = {}
    # alignment MultiheadAttention (1 head)
    p['wq'] = n(ks[0], (D, D), 0.05); p['bq'] = jnp.zeros((1, D), jnp.float32)
    p['wk'] = n(ks[1], (D, D), 0.05); p['bk'] = jnp.zeros((1, D), jnp.float32)
    p['wv'] = n(ks[2], (D, D), 0.05); p['bv'] = jnp.zeros((1, D), jnp.float32)
    p['wo'] = n(ks[3], (D, D), 0.05); p['bo'] = jnp.zeros((1, D), jnp.float32)
    # alignment_layer_norm
    p['g1'] = jnp.ones((1, D), jnp.float32); p['be1'] = jnp.zeros((1, D), jnp.float32)
    # fc1 / fc2
    p['w1'] = n(ks[4], (D, FF), 0.05); p['b1'] = n(ks[5], (1, FF), 0.02)
    p['w2'] = n(ks[6], (FF, D), 0.05); p['b2'] = n(ks[7], (1, D), 0.02)
    # ff_layer_norm
    p['g2'] = jnp.ones((1, D), jnp.float32); p['be2'] = jnp.zeros((1, D), jnp.float32)
    # reset_parameters(): normal(std=0.02) weights, zero biases
    p['wt'] = n(ks[8], (D, C), 0.02); p['bt'] = jnp.zeros((1, C), jnp.float32)
    p['wg'] = n(ks[9], (C, V), 0.02); p['bg'] = jnp.zeros((1, V), jnp.float32)
    p['wd'] = n(ks[10], (C, 3), 0.02); p['bd'] = jnp.zeros((1, 3), jnp.float32)
    return p


def concept_generator_forward(params, outs, snt_state, snt_padding_mask,
                              copy_seq, target, pad_idx, *, block_b=8):
    f32 = jnp.float32
    T0, B0, D = outs.shape
    S0 = snt_state.shape[0]
    C, V = params['wg'].shape

    Tp = _round_up(T0, 8)
    Sp = _round_up(S0, 8)
    Bb = max(1, min(block_b, B0))
    Bp = _round_up(B0, Bb)
    Vpad = _round_up(V, 128)

    # ---- glue: batch-major layouts + target-column gathers (cheap, wrapper side) ----
    outs_b = jnp.transpose(outs, (1, 0, 2)).astype(f32)            # (B, T, D)
    snt_b = jnp.transpose(snt_state, (1, 0, 2)).astype(f32)        # (B, S, D)
    pad_b = snt_padding_mask.astype(f32)[:, None, :]               # (B, 1, S)
    cseq_b = jnp.transpose(copy_seq, (1, 2, 0)).astype(jnp.int32)  # (B, 2, S)
    tgt_b = target.T.astype(jnp.int32)                             # (B, T)

    in_vocab = tgt_b < V
    tclip = jnp.clip(tgt_b, 0, V - 1)
    wgt_b = jnp.transpose(jnp.take(params['wg'], tclip, axis=1), (1, 2, 0))  # (B, T, C)
    wgt_b = jnp.where(in_vocab[:, :, None], wgt_b, 0.0)
    bgt_b = jnp.where(in_vocab, params['bg'][0][tclip], NEG_INF)[:, :, None]  # (B, T, 1)

    def pad_axis(x, axis, new, value=0):
        if x.shape[axis] == new:
            return x
        widths = [(0, 0)] * x.ndim
        widths[axis] = (0, new - x.shape[axis])
        return jnp.pad(x, widths, constant_values=value)

    # pad T/S to multiples of 8 and B to a multiple of the batch block; padded
    # targets use pad_idx (masked out of the loss) and padded keys are masked.
    outs_b = pad_axis(pad_axis(outs_b, 1, Tp), 0, Bp)
    snt_b = pad_axis(pad_axis(snt_b, 1, Sp), 0, Bp)
    pad_b = pad_axis(pad_axis(pad_b, 2, Sp, 1.0), 0, Bp, 1.0)
    cseq_b = pad_axis(pad_axis(cseq_b, 2, Sp, -1), 0, Bp, -1)
    tgt_b = pad_axis(pad_axis(tgt_b, 1, Tp, pad_idx), 0, Bp, pad_idx)[:, :, None]
    wgt_b = pad_axis(pad_axis(wgt_b, 1, Tp), 0, Bp)
    bgt_b = pad_axis(pad_axis(bgt_b, 1, Tp, NEG_INF), 0, Bp, NEG_INF)

    # fused [generator | diverter] weights; padded columns get -1e30 bias so the
    # softmaxes over the padded widths equal the softmaxes over the real widths.
    wg_pad = jnp.pad(params['wg'], ((0, 0), (0, Vpad - V)))
    bg_pad = jnp.pad(params['bg'], ((0, 0), (0, Vpad - V)), constant_values=NEG_INF)
    wd_pad = jnp.pad(params['wd'], ((0, 0), (0, 128 - params['wd'].shape[1])))
    bd_pad = jnp.pad(params['bd'], ((0, 0), (0, 128 - params['bd'].shape[1])),
                     constant_values=NEG_INF)
    wdg = jnp.concatenate([wg_pad, wd_pad], axis=1)                # (C, Vpad + 128)
    bdg = jnp.concatenate([bg_pad, bd_pad], axis=1)                # (1, Vpad + 128)

    per_batch = [outs_b, snt_b, pad_b, cseq_b, tgt_b, wgt_b, bgt_b]
    weights = [params[k] for k in
               ('wq', 'bq', 'wk', 'bk', 'wv', 'bv', 'wo', 'bo',
                'g1', 'be1', 'w1', 'b1', 'w2', 'b2', 'g2', 'be2',
                'wt', 'bt')] + [wdg, bdg]

    def bspec(shape):
        nd = len(shape)
        return pl.BlockSpec((Bb,) + tuple(shape[1:]),
                            lambda b, _nd=nd: (b,) + (0,) * (_nd - 1))

    def wspec(shape):
        nd = len(shape)
        return pl.BlockSpec(tuple(shape), lambda b, _nd=nd: (0,) * _nd)

    in_specs = [bspec(a.shape) for a in per_batch] + [wspec(w.shape) for w in weights]
    out_shape = (jax.ShapeDtypeStruct((Bp, Tp, D), f32),
                 jax.ShapeDtypeStruct((Bp, 1, 1), f32))
    out_specs = [bspec((Bp, Tp, D)), bspec((Bp, 1, 1))]

    # rough VMEM budget from the actual tile sizes (with headroom), clamped to a
    # range safe on v5e/v6e/v7x.
    def _nelems(shape):
        n = 1
        for s in shape:
            n *= s
        return n
    in_tile = sum(_nelems((Bb,) + a.shape[1:]) * a.dtype.itemsize for a in per_batch)
    out_tile = (Bb * Tp * D + Bb) * 4
    w_bytes = sum(_nelems(w.shape) * w.dtype.itemsize for w in weights)
    temp = 8 * Bb * Tp * (Vpad + 128) * 4 + 8 * Bb * Tp * max(Sp, D) * 4
    vmem_limit = int(1.3 * (2 * (in_tile + out_tile + w_bytes) + temp))
    vmem_limit = max(32 << 20, min(vmem_limit, 56 << 20))

    kernel = functools.partial(concept_generator_kernel,
                               scaling=1.0 / (float(D) ** 0.5),
                               vpad=Vpad, pad_idx=int(pad_idx))

    outs_ff_b, loss_b = pl.pallas_call(
        kernel,
        out_shape=out_shape,
        grid_spec=pltpu.PrefetchScalarGridSpec(
            num_scalar_prefetch=0,
            grid=(Bp // Bb,),
            in_specs=in_specs,
            out_specs=out_specs),
        compiler_params=pltpu.CompilerParams(
            dimension_semantics=("parallel",),
            vmem_limit_bytes=vmem_limit),
    )(*per_batch, *weights)

    outs_ff = jnp.transpose(outs_ff_b[:B0, :T0], (1, 0, 2))   # back to time-major [T, B, D]
    concept_loss = loss_b[:B0, 0, 0]                          # [B]
    return concept_loss, outs_ff


def reference_forward(params, outs, snt_state, snt_padding_mask, copy_seq,
                      target, pad_idx):
    """Pure-JAX mirror of the PyTorch forward (eval mode, work=False)."""
    T, B, D = outs.shape
    S = snt_state.shape[0]
    V = params['wg'].shape[1]
    tot_ext = 1 + int(jax.device_get(jnp.max(copy_seq)))
    Vfull = max(V, tot_ext)
    scaling = 1.0 / (D ** 0.5)

    q = (jnp.einsum('tbd,de->tbe', outs, params['wq']) + params['bq'][0]) * scaling
    k = jnp.einsum('sbd,de->sbe', snt_state, params['wk']) + params['bk'][0]
    v = jnp.einsum('sbd,de->sbe', snt_state, params['wv']) + params['bv'][0]
    scores = jnp.einsum('tbd,sbd->tbs', q, k)
    scores = jnp.where(snt_padding_mask[None, :, :], NEG_INF, scores)
    attn_w = jax.nn.softmax(scores, axis=-1)                       # (T, B, S)
    x = jnp.einsum('tbs,sbd->tbd', attn_w, v)
    x = jnp.einsum('tbd,de->tbe', x, params['wo']) + params['bo'][0]
    x = _layer_norm(outs + x, params['g1'][0], params['be1'][0])
    residual = x
    h = jax.nn.relu(jnp.einsum('tbd,df->tbf', x, params['w1']) + params['b1'][0])
    x2 = jnp.einsum('tbf,fd->tbd', h, params['w2']) + params['b2'][0]
    outs2 = _layer_norm(residual + x2, params['g2'][0], params['be2'][0])

    oc = jnp.tanh(jnp.einsum('tbd,dc->tbc', outs2, params['wt']) + params['bt'][0])
    dsm = jax.nn.softmax(jnp.einsum('tbc,ck->tbk', oc, params['wd']) + params['bd'][0], -1)
    gen_gate, map_gate, copy_gate = dsm[..., 0:1], dsm[..., 1:2], dsm[..., 2:3]
    glog = jnp.einsum('tbc,cv->tbv', oc, params['wg']) + params['bg'][0]
    gen_probs = gen_gate * jax.nn.softmax(glog, axis=-1)           # (T, B, V)
    if Vfull > V:
        probs = jnp.concatenate(
            [gen_probs, jnp.zeros((T, B, Vfull - V), jnp.float32)], axis=-1)
    else:
        probs = gen_probs
    copy_gate_cat = jnp.concatenate([copy_gate, map_gate], -1)     # (T, B, 2)
    copy_probs = (copy_gate_cat[:, :, None, :] * attn_w[:, :, :, None]).reshape(T, B, S * 2)
    index = jnp.broadcast_to(
        jnp.transpose(copy_seq, (1, 0, 2)).reshape(1, B, S * 2), (T, B, S * 2))
    probs = probs.at[jnp.arange(T)[:, None, None],
                     jnp.arange(B)[None, :, None],
                     index].add(copy_probs)
    ll = jnp.log(probs + 1e-12)
    loss = -jnp.take_along_axis(ll, target[..., None], axis=-1)[..., 0]
    loss = jnp.where(target == pad_idx, 0.0, loss).sum(0)
    return loss, outs2


if __name__ == "__main__":
    key = jax.random.PRNGKey(0)
    T, S, B, D, FF, C, V = 8, 8, 2, 32, 64, 32, 40
    pad_idx = 0

    k1, k2, k3, k4, kp = jax.random.split(key, 5)
    outs = jax.random.normal(k1, (T, B, D), jnp.float32)
    snt_state = jax.random.normal(k2, (S, B, D), jnp.float32)
    snt_padding_mask = jnp.zeros((B, S), jnp.bool_).at[1, S - 2:].set(True)
    copy_seq = jax.random.randint(k3, (S, B, 2), 1, V + 3)
    copy_seq = copy_seq.at[0, 0, 0].set(V + 3)          # extended-vocab copy id
    target = jax.random.randint(k4, (T, B), 0, V)
    target = target.at[T - 1, :].set(pad_idx)           # some padded targets
    target = target.at[0, 0].set(V + 3)                 # extended-vocab target (copy-only)

    params = make_params(kp, D, FF, C, V)

    loss, outs_ff = concept_generator_forward(
        params, outs, snt_state, snt_padding_mask, copy_seq, target, pad_idx)
    jax.block_until_ready((loss, outs_ff))

    ref_loss, ref_outs = reference_forward(
        params, outs, snt_state, snt_padding_mask, copy_seq, target, pad_idx)

    assert jnp.allclose(loss, ref_loss, rtol=2e-2, atol=2e-2), (loss, ref_loss)
    assert jnp.allclose(outs_ff, ref_outs, rtol=2e-2, atol=2e-2)

    print("KERNEL_OK")
</pallas_src>

<mosaic_0001>
module attributes {stable_mosaic.version = 11 : i64} {
  func.func @concept_generator_kernel(%arg0: i32, %arg1: memref<2x8x32xf32, #tpu.memory_space<vmem>>, %arg2: memref<2x8x32xf32, #tpu.memory_space<vmem>>, %arg3: memref<2x1x8xf32, #tpu.memory_space<vmem>>, %arg4: memref<2x2x8xi32, #tpu.memory_space<vmem>>, %arg5: memref<2x8x1xi32, #tpu.memory_space<vmem>>, %arg6: memref<2x8x32xf32, #tpu.memory_space<vmem>>, %arg7: memref<2x8x1xf32, #tpu.memory_space<vmem>>, %arg8: memref<32x32xf32, #tpu.memory_space<vmem>>, %arg9: memref<1x32xf32, #tpu.memory_space<vmem>>, %arg10: memref<32x32xf32, #tpu.memory_space<vmem>>, %arg11: memref<1x32xf32, #tpu.memory_space<vmem>>, %arg12: memref<32x32xf32, #tpu.memory_space<vmem>>, %arg13: memref<1x32xf32, #tpu.memory_space<vmem>>, %arg14: memref<32x32xf32, #tpu.memory_space<vmem>>, %arg15: memref<1x32xf32, #tpu.memory_space<vmem>>, %arg16: memref<1x32xf32, #tpu.memory_space<vmem>>, %arg17: memref<1x32xf32, #tpu.memory_space<vmem>>, %arg18: memref<32x64xf32, #tpu.memory_space<vmem>>, %arg19: memref<1x64xf32, #tpu.memory_space<vmem>>, %arg20: memref<64x32xf32, #tpu.memory_space<vmem>>, %arg21: memref<1x32xf32, #tpu.memory_space<vmem>>, %arg22: memref<1x32xf32, #tpu.memory_space<vmem>>, %arg23: memref<1x32xf32, #tpu.memory_space<vmem>>, %arg24: memref<32x32xf32, #tpu.memory_space<vmem>>, %arg25: memref<1x32xf32, #tpu.memory_space<vmem>>, %arg26: memref<32x256xf32, #tpu.memory_space<vmem>>, %arg27: memref<1x256xf32, #tpu.memory_space<vmem>>, %arg28: memref<2x8x32xf32, #tpu.memory_space<vmem>>, %arg29: memref<2x1x1xf32, #tpu.memory_space<vmem>>) attributes {dimension_semantics = [#tpu.dimension_semantics<parallel>], iteration_bounds = array<i64: 1>, scalar_prefetch = 0 : i64, scratch_operands = 0 : i64, tpu.core_type = #tpu.core_type<tc>, window_params = [{transform_indices = @transform_0, window_bounds = array<i64: 2, 8, 32>}, {transform_indices = @transform_1, window_bounds = array<i64: 2, 8, 32>}, {transform_indices = @transform_2, window_bounds = array<i64: 2, 1, 8>}, {transform_indices = @transform_3, window_bounds = array<i64: 2, 2, 8>}, {transform_indices = @transform_4, window_bounds = array<i64: 2, 8, 1>}, {transform_indices = @transform_5, window_bounds = array<i64: 2, 8, 32>}, {transform_indices = @transform_6, window_bounds = array<i64: 2, 8, 1>}, {pipeline_mode = #tpu.pipeline_mode<synchronous>, transform_indices = @transform_7, window_bounds = array<i64: 32, 32>}, {pipeline_mode = #tpu.pipeline_mode<synchronous>, transform_indices = @transform_8, window_bounds = array<i64: 1, 32>}, {pipeline_mode = #tpu.pipeline_mode<synchronous>, transform_indices = @transform_9, window_bounds = array<i64: 32, 32>}, {pipeline_mode = #tpu.pipeline_mode<synchronous>, transform_indices = @transform_10, window_bounds = array<i64: 1, 32>}, {pipeline_mode = #tpu.pipeline_mode<synchronous>, transform_indices = @transform_11, window_bounds = array<i64: 32, 32>}, {pipeline_mode = #tpu.pipeline_mode<synchronous>, transform_indices = @transform_12, window_bounds = array<i64: 1, 32>}, {pipeline_mode = #tpu.pipeline_mode<synchronous>, transform_indices = @transform_13, window_bounds = array<i64: 32, 32>}, {pipeline_mode = #tpu.pipeline_mode<synchronous>, transform_indices = @transform_14, window_bounds = array<i64: 1, 32>}, {pipeline_mode = #tpu.pipeline_mode<synchronous>, transform_indices = @transform_15, window_bounds = array<i64: 1, 32>}, {pipeline_mode = #tpu.pipeline_mode<synchronous>, transform_indices = @transform_16, window_bounds = array<i64: 1, 32>}, {pipeline_mode = #tpu.pipeline_mode<synchronous>, transform_indices = @transform_17, window_bounds = array<i64: 32, 64>}, {pipeline_mode = #tpu.pipeline_mode<synchronous>, transform_indices = @transform_18, window_bounds = array<i64: 1, 64>}, {pipeline_mode = #tpu.pipeline_mode<synchronous>, transform_indices = @transform_19, window_bounds = array<i64: 64, 32>}, {pipeline_mode = #tpu.pipeline_mode<synchronous>, transform_indices = @transform_20, window_bounds = array<i64: 1, 32>}, {pipeline_mode = #tpu.pipeline_mode<synchronous>, transform_indices = @transform_21, window_bounds = array<i64: 1, 32>}, {pipeline_mode = #tpu.pipeline_mode<synchronous>, transform_indices = @transform_22, window_bounds = array<i64: 1, 32>}, {pipeline_mode = #tpu.pipeline_mode<synchronous>, transform_indices = @transform_23, window_bounds = array<i64: 32, 32>}, {pipeline_mode = #tpu.pipeline_mode<synchronous>, transform_indices = @transform_24, window_bounds = array<i64: 1, 32>}, {pipeline_mode = #tpu.pipeline_mode<synchronous>, transform_indices = @transform_25, window_bounds = array<i64: 32, 256>}, {pipeline_mode = #tpu.pipeline_mode<synchronous>, transform_indices = @transform_26, window_bounds = array<i64: 1, 256>}, {transform_indices = @transform_27, window_bounds = array<i64: 2, 8, 32>}, {transform_indices = @transform_28, window_bounds = array<i64: 2, 1, 1>}]} {
    %c0 = arith.constant 0 : index
    %c0_0 = arith.constant 0 : index
    %c0_1 = arith.constant 0 : index
    %0 = vector.load %arg1[%c0, %c0_0, %c0_1] : memref<2x8x32xf32, #tpu.memory_space<vmem>>, vector<2x8x32xf32>
    %c0_2 = arith.constant 0 : index
    %c0_3 = arith.constant 0 : index
    %c0_4 = arith.constant 0 : index
    %1 = vector.load %arg2[%c0_2, %c0_3, %c0_4] : memref<2x8x32xf32, #tpu.memory_space<vmem>>, vector<2x8x32xf32>
    %c0_5 = arith.constant 0 : index
    %c0_6 = arith.constant 0 : index
    %c0_7 = arith.constant 0 : index
    %2 = vector.load %arg3[%c0_5, %c0_6, %c0_7] : memref<2x1x8xf32, #tpu.memory_space<vmem>>, vector<2x1x8xf32>
    %3 = vector.shape_cast %0 : vector<2x8x32xf32> to vector<16x32xf32>
    %4 = vector.shape_cast %1 : vector<2x8x32xf32> to vector<16x32xf32>
    %c0_8 = arith.constant 0 : index
    %c0_9 = arith.constant 0 : index
    %5 = vector.load %arg8[%c0_8, %c0_9] : memref<32x32xf32, #tpu.memory_space<vmem>>, vector<32x32xf32>
    %cst = arith.constant dense<0.000000e+00> : vector<16x32xf32>
    %6 = tpu.matmul %3, %5, %cst {dimension_numbers = #tpu.dot_dimension_numbers<[1], [0], [0], [1], [0, 0, 1, 1], [], []>} : vector<16x32xf32>, vector<32x32xf32>, vector<16x32xf32> -> vector<16x32xf32>
    %c0_10 = arith.constant 0 : index
    %c0_11 = arith.constant 0 : index
    %7 = vector.load %arg9[%c0_10, %c0_11] : memref<1x32xf32, #tpu.memory_space<vmem>>, vector<1x32xf32>
    %8 = vector.broadcast %7 : vector<1x32xf32> to vector<16x32xf32>
    %9 = arith.addf %6, %8 : vector<16x32xf32>
    %cst_12 = arith.constant 0.176776692 : f32
    %10 = vector.broadcast %cst_12 : f32 to vector<16x32xf32>
    %11 = arith.mulf %9, %10 : vector<16x32xf32>
    %c0_13 = arith.constant 0 : index
    %c0_14 = arith.constant 0 : index
    %12 = vector.load %arg10[%c0_13, %c0_14] : memref<32x32xf32, #tpu.memory_space<vmem>>, vector<32x32xf32>
    %cst_15 = arith.constant dense<0.000000e+00> : vector<16x32xf32>
    %13 = tpu.matmul %4, %12, %cst_15 {dimension_numbers = #tpu.dot_dimension_numbers<[1], [0], [0], [1], [0, 0, 1, 1], [], []>} : vector<16x32xf32>, vector<32x32xf32>, vector<16x32xf32> -> vector<16x32xf32>
    %c0_16 = arith.constant 0 : index
    %c0_17 = arith.constant 0 : index
    %14 = vector.load %arg11[%c0_16, %c0_17] : memref<1x32xf32, #tpu.memory_space<vmem>>, vector<1x32xf32>
    %15 = vector.broadcast %14 : vector<1x32xf32> to vector<16x32xf32>
    %16 = arith.addf %13, %15 : vector<16x32xf32>
    %c0_18 = arith.constant 0 : index
    %c0_19 = arith.constant 0 : index
    %17 = vector.load %arg12[%c0_18, %c0_19] : memref<32x32xf32, #tpu.memory_space<vmem>>, vector<32x32xf32>
    %cst_20 = arith.constant dense<0.000000e+00> : vector<16x32xf32>
    %18 = tpu.matmul %4, %17, %cst_20 {dimension_numbers = #tpu.dot_dimension_numbers<[1], [0], [0], [1], [0, 0, 1, 1], [], []>} : vector<16x32xf32>, vector<32x32xf32>, vector<16x32xf32> -> vector<16x32xf32>
    %c0_21 = arith.constant 0 : index
    %c0_22 = arith.constant 0 : index
    %19 = vector.load %arg13[%c0_21, %c0_22] : memref<1x32xf32, #tpu.memory_space<vmem>>, vector<1x32xf32>
    %20 = vector.broadcast %19 : vector<1x32xf32> to vector<16x32xf32>
    %21 = arith.addf %18, %20 : vector<16x32xf32>
    %22 = vector.shape_cast %11 : vector<16x32xf32> to vector<2x8x32xf32>
    %23 = vector.shape_cast %16 : vector<16x32xf32> to vector<2x8x32xf32>
    %24 = vector.shape_cast %21 : vector<16x32xf32> to vector<2x8x32xf32>
    "tpu.trace_start"() <{level = 10 : i32, message = "btd,bsd->bts"}> : () -> ()
    %cst_23 = arith.constant dense<0.000000e+00> : vector<2x8x8xf32>
    %25 = tpu.matmul %22, %23, %cst_23 {dimension_numbers = #tpu.dot_dimension_numbers<[2], [2], [1], [1], [0, 0, 0, 1, 1, 1], [0], [0]>} : vector<2x8x32xf32>, vector<2x8x32xf32>, vector<2x8x8xf32> -> vector<2x8x8xf32>
    %cst_24 = arith.constant 5.000000e-01 : f32
    "tpu.trace_stop"() : () -> ()
    %26 = vector.broadcast %cst_24 : f32 to vector<2x1x8xf32>
    %27 = arith.cmpf ogt, %2, %26 : vector<2x1x8xf32>
    %cst_25 = arith.constant -1.000000e+30 : f32
    %28 = vector.shape_cast %27 : vector<2x1x8xi1> to vector<2x1x8xi1>
    %29 = vector.broadcast %28 : vector<2x1x8xi1> to vector<2x8x8xi1>
    %30 = vector.broadcast %cst_25 : f32 to vector<2x8x8xf32>
    %31 = arith.select %29, %30, %25 : vector<2x8x8xi1>, vector<2x8x8xf32>
    %cst_26 = arith.constant dense<0xFF800000> : vector<2x8xf32>
    %32 = vector.multi_reduction <maximumf>, %31, %cst_26 [2] : vector<2x8x8xf32> to vector<2x8xf32>
    %33 = vector.shape_cast %32 : vector<2x8xf32> to vector<2x8x1xf32>
    %34 = vector.broadcast %33 : vector<2x8x1xf32> to vector<2x8x8xf32>
    %35 = arith.subf %31, %34 : vector<2x8x8xf32>
    %36 = math.exp %35 : vector<2x8x8xf32>
    %cst_27 = arith.constant dense<0.000000e+00> : vector<2x8xf32>
    %37 = vector.multi_reduction <add>, %36, %cst_27 [2] : vector<2x8x8xf32> to vector<2x8xf32>
    %38 = vector.shape_cast %37 : vector<2x8xf32> to vector<2x8x1xf32>
    %39 = tpu.reciprocal %38 {approx = true} : vector<2x8x1xf32> -> vector<2x8x1xf32>
    %40 = vector.broadcast %39 : vector<2x8x1xf32> to vector<2x8x8xf32>
    %41 = arith.mulf %36, %40 : vector<2x8x8xf32>
    "tpu.trace_start"() <{level = 10 : i32, message = "bts,bsd->btd"}> : () -> ()
    %cst_28 = arith.constant dense<0.000000e+00> : vector<2x8x32xf32>
    %42 = tpu.matmul %41, %24, %cst_28 {dimension_numbers = #tpu.dot_dimension_numbers<[2], [1], [1], [2], [0, 0, 0, 1, 1, 2], [0], [0]>} : vector<2x8x8xf32>, vector<2x8x32xf32>, vector<2x8x32xf32> -> vector<2x8x32xf32>
    "tpu.trace_stop"() : () -> ()
    %43 = vector.shape_cast %42 : vector<2x8x32xf32> to vector<16x32xf32>
    %c0_29 = arith.constant 0 : index
    %c0_30 = arith.constant 0 : index
    %44 = vector.load %arg14[%c0_29, %c0_30] : memref<32x32xf32, #tpu.memory_space<vmem>>, vector<32x32xf32>
    %cst_31 = arith.constant dense<0.000000e+00> : vector<16x32xf32>
    %45 = tpu.matmul %43, %44, %cst_31 {dimension_numbers = #tpu.dot_dimension_numbers<[1], [0], [0], [1], [0, 0, 1, 1], [], []>} : vector<16x32xf32>, vector<32x32xf32>, vector<16x32xf32> -> vector<16x32xf32>
    %c0_32 = arith.constant 0 : index
    %c0_33 = arith.constant 0 : index
    %46 = vector.load %arg15[%c0_32, %c0_33] : memref<1x32xf32, #tpu.memory_space<vmem>>, vector<1x32xf32>
    %47 = vector.broadcast %46 : vector<1x32xf32> to vector<16x32xf32>
    %48 = arith.addf %45, %47 : vector<16x32xf32>
    %49 = arith.addf %3, %48 : vector<16x32xf32>
    %c0_34 = arith.constant 0 : index
    %c0_35 = arith.constant 0 : index
    %50 = vector.load %arg16[%c0_34, %c0_35] : memref<1x32xf32, #tpu.memory_space<vmem>>, vector<1x32xf32>
    %c0_36 = arith.constant 0 : index
    %c0_37 = arith.constant 0 : index
    %51 = vector.load %arg17[%c0_36, %c0_37] : memref<1x32xf32, #tpu.memory_space<vmem>>, vector<1x32xf32>
    %cst_38 = arith.constant dense<0.000000e+00> : vector<16xf32>
    %52 = vector.multi_reduction <add>, %49, %cst_38 [1] : vector<16x32xf32> to vector<16xf32>
    %53 = vector.shape_cast %52 : vector<16xf32> to vector<16x1xf32>
    %cst_39 = arith.constant 3.200000e+01 : f32
    %54 = vector.broadcast %cst_39 : f32 to vector<16x1xf32>
    %55 = arith.divf %53, %54 : vector<16x1xf32>
    %56 = vector.broadcast %55 : vector<16x1xf32> to vector<16x32xf32>
    %57 = arith.subf %49, %56 : vector<16x32xf32>
    %58 = arith.mulf %57, %57 : vector<16x32xf32>
    %cst_40 = arith.constant dense<0.000000e+00> : vector<16xf32>
    %59 = vector.multi_reduction <add>, %58, %cst_40 [1] : vector<16x32xf32> to vector<16xf32>
    %60 = vector.shape_cast %59 : vector<16xf32> to vector<16x1xf32>
    %cst_41 = arith.constant 3.200000e+01 : f32
    %61 = vector.broadcast %cst_41 : f32 to vector<16x1xf32>
    %62 = arith.divf %60, %61 : vector<16x1xf32>
    %63 = vector.broadcast %55 : vector<16x1xf32> to vector<16x32xf32>
    %64 = arith.subf %49, %63 : vector<16x32xf32>
    %cst_42 = arith.constant 9.99999974E-6 : f32
    %65 = vector.broadcast %cst_42 : f32 to vector<16x1xf32>
    %66 = arith.addf %62, %65 : vector<16x1xf32>
    %67 = math.rsqrt %66 : vector<16x1xf32>
    %68 = vector.broadcast %67 : vector<16x1xf32> to vector<16x32xf32>
    %69 = arith.mulf %64, %68 : vector<16x32xf32>
    %70 = vector.broadcast %50 : vector<1x32xf32> to vector<16x32xf32>
    %71 = arith.mulf %69, %70 : vector<16x32xf32>
    %72 = vector.broadcast %51 : vector<1x32xf32> to vector<16x32xf32>
    %73 = arith.addf %71, %72 : vector<16x32xf32>
    %c0_43 = arith.constant 0 : index
    %c0_44 = arith.constant 0 : index
    %74 = vector.load %arg18[%c0_43, %c0_44] : memref<32x64xf32, #tpu.memory_space<vmem>>, vector<32x64xf32>
    %cst_45 = arith.constant dense<0.000000e+00> : vector<16x64xf32>
    %75 = tpu.matmul %73, %74, %cst_45 {dimension_numbers = #tpu.dot_dimension_numbers<[1], [0], [0], [1], [0, 0, 1, 1], [], []>} : vector<16x32xf32>, vector<32x64xf32>, vector<16x64xf32> -> vector<16x64xf32>
    %c0_46 = arith.constant 0 : index
    %c0_47 = arith.constant 0 : index
    %76 = vector.load %arg19[%c0_46, %c0_47] : memref<1x64xf32, #tpu.memory_space<vmem>>, vector<1x64xf32>
    %77 = vector.broadcast %76 : vector<1x64xf32> to vector<16x64xf32>
    %78 = arith.addf %75, %77 : vector<16x64xf32>
    %cst_48 = arith.constant 0.000000e+00 : f32
    %79 = vector.broadcast %cst_48 : f32 to vector<16x64xf32>
    %80 = arith.maximumf %78, %79 : vector<16x64xf32>
    %c0_49 = arith.constant 0 : index
    %c0_50 = arith.constant 0 : index
    %81 = vector.load %arg20[%c0_49, %c0_50] : memref<64x32xf32, #tpu.memory_space<vmem>>, vector<64x32xf32>
    %cst_51 = arith.constant dense<0.000000e+00> : vector<16x32xf32>
    %82 = tpu.matmul %80, %81, %cst_51 {dimension_numbers = #tpu.dot_dimension_numbers<[1], [0], [0], [1], [0, 0, 1, 1], [], []>} : vector<16x64xf32>, vector<64x32xf32>, vector<16x32xf32> -> vector<16x32xf32>
    %c0_52 = arith.constant 0 : index
    %c0_53 = arith.constant 0 : index
    %83 = vector.load %arg21[%c0_52, %c0_53] : memref<1x32xf32, #tpu.memory_space<vmem>>, vector<1x32xf32>
    %84 = vector.broadcast %83 : vector<1x32xf32> to vector<16x32xf32>
    %85 = arith.addf %82, %84 : vector<16x32xf32>
    %86 = arith.addf %73, %85 : vector<16x32xf32>
    %c0_54 = arith.constant 0 : index
    %c0_55 = arith.constant 0 : index
    %87 = vector.load %arg22[%c0_54, %c0_55] : memref<1x32xf32, #tpu.memory_space<vmem>>, vector<1x32xf32>
    %c0_56 = arith.constant 0 : index
    %c0_57 = arith.constant 0 : index
    %88 = vector.load %arg23[%c0_56, %c0_57] : memref<1x32xf32, #tpu.memory_space<vmem>>, vector<1x32xf32>
    %cst_58 = arith.constant dense<0.000000e+00> : vector<16xf32>
    %89 = vector.multi_reduction <add>, %86, %cst_58 [1] : vector<16x32xf32> to vector<16xf32>
    %90 = vector.shape_cast %89 : vector<16xf32> to vector<16x1xf32>
    %cst_59 = arith.constant 3.200000e+01 : f32
    %91 = vector.broadcast %cst_59 : f32 to vector<16x1xf32>
    %92 = arith.divf %90, %91 : vector<16x1xf32>
    %93 = vector.broadcast %92 : vector<16x1xf32> to vector<16x32xf32>
    %94 = arith.subf %86, %93 : vector<16x32xf32>
    %95 = arith.mulf %94, %94 : vector<16x32xf32>
    %cst_60 = arith.constant dense<0.000000e+00> : vector<16xf32>
    %96 = vector.multi_reduction <add>, %95, %cst_60 [1] : vector<16x32xf32> to vector<16xf32>
    %97 = vector.shape_cast %96 : vector<16xf32> to vector<16x1xf32>
    %cst_61 = arith.constant 3.200000e+01 : f32
    %98 = vector.broadcast %cst_61 : f32 to vector<16x1xf32>
    %99 = arith.divf %97, %98 : vector<16x1xf32>
    %100 = vector.broadcast %92 : vector<16x1xf32> to vector<16x32xf32>
    %101 = arith.subf %86, %100 : vector<16x32xf32>
    %cst_62 = arith.constant 9.99999974E-6 : f32
    %102 = vector.broadcast %cst_62 : f32 to vector<16x1xf32>
    %103 = arith.addf %99, %102 : vector<16x1xf32>
    %104 = math.rsqrt %103 : vector<16x1xf32>
    %105 = vector.broadcast %104 : vector<16x1xf32> to vector<16x32xf32>
    %106 = arith.mulf %101, %105 : vector<16x32xf32>
    %107 = vector.broadcast %87 : vector<1x32xf32> to vector<16x32xf32>
    %108 = arith.mulf %106, %107 : vector<16x32xf32>
    %109 = vector.broadcast %88 : vector<1x32xf32> to vector<16x32xf32>
    %110 = arith.addf %108, %109 : vector<16x32xf32>
    %111 = vector.shape_cast %110 : vector<16x32xf32> to vector<2x8x32xf32>
    %c0_63 = arith.constant 0 : index
    %c0_64 = arith.constant 0 : index
    %c0_65 = arith.constant 0 : index
    %112 = vector.load %arg28[%c0_63, %c0_64, %c0_65] : memref<2x8x32xf32, #tpu.memory_space<vmem>>, vector<2x8x32xf32>
    tpu.vector_store %arg28[%c0_63, %c0_64, %c0_65], %111 {strides = array<i32>} : memref<2x8x32xf32, #tpu.memory_space<vmem>>, vector<2x8x32xf32>,
    %c0_66 = arith.constant 0 : index
    %c0_67 = arith.constant 0 : index
    %113 = vector.load %arg24[%c0_66, %c0_67] : memref<32x32xf32, #tpu.memory_space<vmem>>, vector<32x32xf32>
    %cst_68 = arith.constant dense<0.000000e+00> : vector<16x32xf32>
    %114 = tpu.matmul %110, %113, %cst_68 {dimension_numbers = #tpu.dot_dimension_numbers<[1], [0], [0], [1], [0, 0, 1, 1], [], []>} : vector<16x32xf32>, vector<32x32xf32>, vector<16x32xf32> -> vector<16x32xf32>
    %c0_69 = arith.constant 0 : index
    %c0_70 = arith.constant 0 : index
    %115 = vector.load %arg25[%c0_69, %c0_70] : memref<1x32xf32, #tpu.memory_space<vmem>>, vector<1x32xf32>
    %116 = vector.broadcast %115 : vector<1x32xf32> to vector<16x32xf32>
    %117 = arith.addf %114, %116 : vector<16x32xf32>
    %118 = math.tanh %117 : vector<16x32xf32>
    %c0_71 = arith.constant 0 : index
    %c0_72 = arith.constant 0 : index
    %119 = vector.load %arg26[%c0_71, %c0_72] : memref<32x256xf32, #tpu.memory_space<vmem>>, vector<32x256xf32>
    %cst_73 = arith.constant dense<0.000000e+00> : vector<16x256xf32>
    %120 = tpu.matmul %118, %119, %cst_73 {dimension_numbers = #tpu.dot_dimension_numbers<[1], [0], [0], [1], [0, 0, 1, 1], [], []>} : vector<16x32xf32>, vector<32x256xf32>, vector<16x256xf32> -> vector<16x256xf32>
    %c0_74 = arith.constant 0 : index
    %c0_75 = arith.constant 0 : index
    %121 = vector.load %arg27[%c0_74, %c0_75] : memref<1x256xf32, #tpu.memory_space<vmem>>, vector<1x256xf32>
    %122 = vector.broadcast %121 : vector<1x256xf32> to vector<16x256xf32>
    %123 = arith.addf %120, %122 : vector<16x256xf32>
    %124 = vector.extract_strided_slice %123 {offsets = [0, 0], sizes = [16, 128], strides = [1, 1]} : vector<16x256xf32> to vector<16x128xf32>
    %125 = vector.extract_strided_slice %123 {offsets = [0, 128], sizes = [16, 128], strides = [1, 1]} : vector<16x256xf32> to vector<16x128xf32>
    %cst_76 = arith.constant dense<0xFF800000> : vector<16xf32>
    %126 = vector.multi_reduction <maximumf>, %125, %cst_76 [1] : vector<16x128xf32> to vector<16xf32>
    %127 = vector.shape_cast %126 : vector<16xf32> to vector<16x1xf32>
    %128 = vector.broadcast %127 : vector<16x1xf32> to vector<16x128xf32>
    %129 = arith.subf %125, %128 : vector<16x128xf32>
    %130 = math.exp %129 : vector<16x128xf32>
    %cst_77 = arith.constant dense<0.000000e+00> : vector<16xf32>
    %131 = vector.multi_reduction <add>, %130, %cst_77 [1] : vector<16x128xf32> to vector<16xf32>
    %132 = vector.shape_cast %131 : vector<16xf32> to vector<16x1xf32>
    %133 = tpu.reciprocal %132 {approx = true} : vector<16x1xf32> -> vector<16x1xf32>
    %134 = vector.broadcast %133 : vector<16x1xf32> to vector<16x128xf32>
    %135 = arith.mulf %130, %134 : vector<16x128xf32>
    %136 = vector.extract_strided_slice %135 {offsets = [0, 0], sizes = [16, 1], strides = [1, 1]} : vector<16x128xf32> to vector<16x1xf32>
    %137 = vector.shape_cast %136 : vector<16x1xf32> to vector<2x8x1xf32>
    %138 = vector.extract_strided_slice %135 {offsets = [0, 1], sizes = [16, 1], strides = [1, 1]} : vector<16x128xf32> to vector<16x1xf32>
    %139 = vector.shape_cast %138 : vector<16x1xf32> to vector<2x8x1xf32>
    %140 = vector.extract_strided_slice %135 {offsets = [0, 2], sizes = [16, 1], strides = [1, 1]} : vector<16x128xf32> to vector<16x1xf32>
    %141 = vector.shape_cast %140 : vector<16x1xf32> to vector<2x8x1xf32>
    %cst_78 = arith.constant dense<0xFF800000> : vector<16xf32>
    %142 = vector.multi_reduction <maximumf>, %124, %cst_78 [1] : vector<16x128xf32> to vector<16xf32>
    %143 = vector.shape_cast %142 : vector<16xf32> to vector<16x1xf32>
    %144 = vector.broadcast %143 : vector<16x1xf32> to vector<16x128xf32>
    %145 = arith.subf %124, %144 : vector<16x128xf32>
    %146 = math.exp %145 : vector<16x128xf32>
    %cst_79 = arith.constant dense<0.000000e+00> : vector<16xf32>
    %147 = vector.multi_reduction <add>, %146, %cst_79 [1] : vector<16x128xf32> to vector<16xf32>
    %148 = vector.shape_cast %147 : vector<16xf32> to vector<16x1xf32>
    %149 = tpu.reciprocal %148 {approx = true} : vector<16x1xf32> -> vector<16x1xf32>
    %150 = vector.shape_cast %118 : vector<16x32xf32> to vector<2x8x32xf32>
    %c0_80 = arith.constant 0 : index
    %c0_81 = arith.constant 0 : index
    %c0_82 = arith.constant 0 : index
    %151 = vector.load %arg6[%c0_80, %c0_81, %c0_82] : memref<2x8x32xf32, #tpu.memory_space<vmem>>, vector<2x8x32xf32>
    %152 = arith.mulf %150, %151 : vector<2x8x32xf32>
    %cst_83 = arith.constant dense<0.000000e+00> : vector<2x8xf32>
    %153 = vector.multi_reduction <add>, %152, %cst_83 [2] : vector<2x8x32xf32> to vector<2x8xf32>
    %154 = vector.shape_cast %153 : vector<2x8xf32> to vector<2x8x1xf32>
    %c0_84 = arith.constant 0 : index
    %c0_85 = arith.constant 0 : index
    %c0_86 = arith.constant 0 : index
    %155 = vector.load %arg7[%c0_84, %c0_85, %c0_86] : memref<2x8x1xf32, #tpu.memory_space<vmem>>, vector<2x8x1xf32>
    %156 = arith.addf %154, %155 : vector<2x8x1xf32>
    %157 = vector.shape_cast %143 : vector<16x1xf32> to vector<2x8x1xf32>
    %158 = arith.subf %156, %157 : vector<2x8x1xf32>
    %159 = math.exp %158 : vector<2x8x1xf32>
    %160 = arith.mulf %137, %159 : vector<2x8x1xf32>
    %161 = vector.shape_cast %149 : vector<16x1xf32> to vector<2x8x1xf32>
    %162 = arith.mulf %160, %161 : vector<2x8x1xf32>
    %c0_87 = arith.constant 0 : index
    %c0_88 = arith.constant 0 : index
    %c0_89 = arith.constant 0 : index
    %163 = vector.load %arg4[%c0_87, %c0_88, %c0_89] : memref<2x2x8xi32, #tpu.memory_space<vmem>>, vector<2x2x8xi32>
    %c0_90 = arith.constant 0 : index
    %c0_91 = arith.constant 0 : index
    %c0_92 = arith.constant 0 : index
    %164 = vector.load %arg5[%c0_90, %c0_91, %c0_92] : memref<2x8x1xi32, #tpu.memory_space<vmem>>, vector<2x8x1xi32>
    %165 = vector.extract_strided_slice %163 {offsets = [0, 0, 0], sizes = [2, 1, 8], strides = [1, 1, 1]} : vector<2x2x8xi32> to vector<2x1x8xi32>
    %166 = vector.broadcast %165 : vector<2x1x8xi32> to vector<2x8x8xi32>
    %167 = vector.broadcast %164 : vector<2x8x1xi32> to vector<2x8x8xi32>
    %168 = arith.cmpi eq, %166, %167 : vector<2x8x8xi32>
    %169 = arith.extui %168 : vector<2x8x8xi1> to vector<2x8x8xi32>
    %170 = arith.sitofp %169 : vector<2x8x8xi32> to vector<2x8x8xf32>
    %171 = vector.extract_strided_slice %163 {offsets = [0, 1, 0], sizes = [2, 1, 8], strides = [1, 1, 1]} : vector<2x2x8xi32> to vector<2x1x8xi32>
    %172 = vector.broadcast %171 : vector<2x1x8xi32> to vector<2x8x8xi32>
    %173 = vector.broadcast %164 : vector<2x8x1xi32> to vector<2x8x8xi32>
    %174 = arith.cmpi eq, %172, %173 : vector<2x8x8xi32>
    %175 = arith.extui %174 : vector<2x8x8xi1> to vector<2x8x8xi32>
    %176 = arith.sitofp %175 : vector<2x8x8xi32> to vector<2x8x8xf32>
    %177 = arith.mulf %41, %170 : vector<2x8x8xf32>
    %cst_93 = arith.constant dense<0.000000e+00> : vector<2x8xf32>
    %178 = vector.multi_reduction <add>, %177, %cst_93 [2] : vector<2x8x8xf32> to vector<2x8xf32>
    %179 = vector.shape_cast %178 : vector<2x8xf32> to vector<2x8x1xf32>
    %180 = arith.mulf %141, %179 : vector<2x8x1xf32>
    %181 = arith.mulf %41, %176 : vector<2x8x8xf32>
    %cst_94 = arith.constant dense<0.000000e+00> : vector<2x8xf32>
    %182 = vector.multi_reduction <add>, %181, %cst_94 [2] : vector<2x8x8xf32> to vector<2x8xf32>
    %183 = vector.shape_cast %182 : vector<2x8xf32> to vector<2x8x1xf32>
    %184 = arith.mulf %139, %183 : vector<2x8x1xf32>
    %185 = arith.addf %180, %184 : vector<2x8x1xf32>
    %186 = arith.addf %162, %185 : vector<2x8x1xf32>
    %c0_i32 = arith.constant 0 : i32
    %187 = vector.broadcast %c0_i32 : i32 to vector<2x8x1xi32>
    %188 = arith.cmpi ne, %164, %187 : vector<2x8x1xi32>
    %189 = arith.extui %188 : vector<2x8x1xi1> to vector<2x8x1xi32>
    %190 = arith.sitofp %189 : vector<2x8x1xi32> to vector<2x8x1xf32>
    %cst_95 = arith.constant 9.99999996E-13 : f32
    %191 = vector.broadcast %cst_95 : f32 to vector<2x8x1xf32>
    %192 = arith.addf %186, %191 : vector<2x8x1xf32>
    %193 = math.log %192 : vector<2x8x1xf32>
    %cst_96 = arith.constant 0.000000e+00 : f32
    %194 = vector.broadcast %cst_96 : f32 to vector<2x8x1xf32>
    %195 = arith.subf %194, %193 : vector<2x8x1xf32>
    %196 = arith.mulf %195, %190 : vector<2x8x1xf32>
    %cst_97 = arith.constant dense<0.000000e+00> : vector<2x1xf32>
    %197 = vector.multi_reduction <add>, %196, %cst_97 [1] : vector<2x8x1xf32> to vector<2x1xf32>
    %198 = vector.shape_cast %197 : vector<2x1xf32> to vector<2x1x1xf32>
    %c0_98 = arith.constant 0 : index
    %c0_99 = arith.constant 0 : index
    %c0_100 = arith.constant 0 : index
    %199 = vector.load %arg29[%c0_98, %c0_99, %c0_100] : memref<2x1x1xf32, #tpu.memory_space<vmem>>, vector<2x1x1xf32>
    tpu.vector_store %arg29[%c0_98, %c0_99, %c0_100], %198 {strides = array<i32>} : memref<2x1x1xf32, #tpu.memory_space<vmem>>, vector<2x1x1xf32>,
    return
  }
  func.func @transform_0(%arg0: i32) -> (i32, i32, i32) {
    %c0_i32 = arith.constant 0 : i32
    %c0_i32_0 = arith.constant 0 : i32
    %c0_i32_1 = arith.constant 0 : i32
    return %arg0, %c0_i32, %c0_i32_0 : i32, i32, i32
  }
  func.func @transform_1(%arg0: i32) -> (i32, i32, i32) {
    %c0_i32 = arith.constant 0 : i32
    %c0_i32_0 = arith.constant 0 : i32
    %c0_i32_1 = arith.constant 0 : i32
    return %arg0, %c0_i32, %c0_i32_0 : i32, i32, i32
  }
  func.func @transform_2(%arg0: i32) -> (i32, i32, i32) {
    %c0_i32 = arith.constant 0 : i32
    %c0_i32_0 = arith.constant 0 : i32
    %c0_i32_1 = arith.constant 0 : i32
    return %arg0, %c0_i32, %c0_i32_0 : i32, i32, i32
  }
  func.func @transform_3(%arg0: i32) -> (i32, i32, i32) {
    %c0_i32 = arith.constant 0 : i32
    %c0_i32_0 = arith.constant 0 : i32
    %c0_i32_1 = arith.constant 0 : i32
    return %arg0, %c0_i32, %c0_i32_0 : i32, i32, i32
  }
  func.func @transform_4(%arg0: i32) -> (i32, i32, i32) {
    %c0_i32 = arith.constant 0 : i32
    %c0_i32_0 = arith.constant 0 : i32
    %c0_i32_1 = arith.constant 0 : i32
    return %arg0, %c0_i32, %c0_i32_0 : i32, i32, i32
  }
  func.func @transform_5(%arg0: i32) -> (i32, i32, i32) {
    %c0_i32 = arith.constant 0 : i32
    %c0_i32_0 = arith.constant 0 : i32
    %c0_i32_1 = arith.constant 0 : i32
    return %arg0, %c0_i32, %c0_i32_0 : i32, i32, i32
  }
  func.func @transform_6(%arg0: i32) -> (i32, i32, i32) {
    %c0_i32 = arith.constant 0 : i32
    %c0_i32_0 = arith.constant 0 : i32
    %c0_i32_1 = arith.constant 0 : i32
    return %arg0, %c0_i32, %c0_i32_0 : i32, i32, i32
  }
  func.func @transform_7(%arg0: i32) -> (i32, i32) {
    %c0_i32 = arith.constant 0 : i32
    %c0_i32_0 = arith.constant 0 : i32
    %c0_i32_1 = arith.constant 0 : i32
    return %c0_i32, %c0_i32_0 : i32, i32
  }
  func.func @transform_8(%arg0: i32) -> (i32, i32) {
    %c0_i32 = arith.constant 0 : i32
    %c0_i32_0 = arith.constant 0 : i32
    %c0_i32_1 = arith.constant 0 : i32
    return %c0_i32, %c0_i32_0 : i32, i32
  }
  func.func @transform_9(%arg0: i32) -> (i32, i32) {
    %c0_i32 = arith.constant 0 : i32
    %c0_i32_0 = arith.constant 0 : i32
    %c0_i32_1 = arith.constant 0 : i32
    return %c0_i32, %c0_i32_0 : i32, i32
  }
  func.func @transform_10(%arg0: i32) -> (i32, i32) {
    %c0_i32 = arith.constant 0 : i32
    %c0_i32_0 = arith.constant 0 : i32
    %c0_i32_1 = arith.constant 0 : i32
    return %c0_i32, %c0_i32_0 : i32, i32
  }
  func.func @transform_11(%arg0: i32) -> (i32, i32) {
    %c0_i32 = arith.constant 0 : i32
    %c0_i32_0 = arith.constant 0 : i32
    %c0_i32_1 = arith.constant 0 : i32
    return %c0_i32, %c0_i32_0 : i32, i32
  }
  func.func @transform_12(%arg0: i32) -> (i32, i32) {
    %c0_i32 = arith.constant 0 : i32
    %c0_i32_0 = arith.constant 0 : i32
    %c0_i32_1 = arith.constant 0 : i32
    return %c0_i32, %c0_i32_0 : i32, i32
  }
  func.func @transform_13(%arg0: i32) -> (i32, i32) {
    %c0_i32 = arith.constant 0 : i32
    %c0_i32_0 = arith.constant 0 : i32
    %c0_i32_1 = arith.constant 0 : i32
    return %c0_i32, %c0_i32_0 : i32, i32
  }
  func.func @transform_14(%arg0: i32) -> (i32, i32) {
    %c0_i32 = arith.constant 0 : i32
    %c0_i32_0 = arith.constant 0 : i32
    %c0_i32_1 = arith.constant 0 : i32
    return %c0_i32, %c0_i32_0 : i32, i32
  }
  func.func @transform_15(%arg0: i32) -> (i32, i32) {
    %c0_i32 = arith.constant 0 : i32
    %c0_i32_0 = arith.constant 0 : i32
    %c0_i32_1 = arith.constant 0 : i32
    return %c0_i32, %c0_i32_0 : i32, i32
  }
  func.func @transform_16(%arg0: i32) -> (i32, i32) {
    %c0_i32 = arith.constant 0 : i32
    %c0_i32_0 = arith.constant 0 : i32
    %c0_i32_1 = arith.constant 0 : i32
    return %c0_i32, %c0_i32_0 : i32, i32
  }
  func.func @transform_17(%arg0: i32) -> (i32, i32) {
    %c0_i32 = arith.constant 0 : i32
    %c0_i32_0 = arith.constant 0 : i32
    %c0_i32_1 = arith.constant 0 : i32
    return %c0_i32, %c0_i32_0 : i32, i32
  }
  func.func @transform_18(%arg0: i32) -> (i32, i32) {
    %c0_i32 = arith.constant 0 : i32
    %c0_i32_0 = arith.constant 0 : i32
    %c0_i32_1 = arith.constant 0 : i32
    return %c0_i32, %c0_i32_0 : i32, i32
  }
  func.func @transform_19(%arg0: i32) -> (i32, i32) {
    %c0_i32 = arith.constant 0 : i32
    %c0_i32_0 = arith.constant 0 : i32
    %c0_i32_1 = arith.constant 0 : i32
    return %c0_i32, %c0_i32_0 : i32, i32
  }
  func.func @transform_20(%arg0: i32) -> (i32, i32) {
    %c0_i32 = arith.constant 0 : i32
    %c0_i32_0 = arith.constant 0 : i32
    %c0_i32_1 = arith.constant 0 : i32
    return %c0_i32, %c0_i32_0 : i32, i32
  }
  func.func @transform_21(%arg0: i32) -> (i32, i32) {
    %c0_i32 = arith.constant 0 : i32
    %c0_i32_0 = arith.constant 0 : i32
    %c0_i32_1 = arith.constant 0 : i32
    return %c0_i32, %c0_i32_0 : i32, i32
  }
  func.func @transform_22(%arg0: i32) -> (i32, i32) {
    %c0_i32 = arith.constant 0 : i32
    %c0_i32_0 = arith.constant 0 : i32
    %c0_i32_1 = arith.constant 0 : i32
    return %c0_i32, %c0_i32_0 : i32, i32
  }
  func.func @transform_23(%arg0: i32) -> (i32, i32) {
    %c0_i32 = arith.constant 0 : i32
    %c0_i32_0 = arith.constant 0 : i32
    %c0_i32_1 = arith.constant 0 : i32
    return %c0_i32, %c0_i32_0 : i32, i32
  }
  func.func @transform_24(%arg0: i32) -> (i32, i32) {
    %c0_i32 = arith.constant 0 : i32
    %c0_i32_0 = arith.constant 0 : i32
    %c0_i32_1 = arith.constant 0 : i32
    return %c0_i32, %c0_i32_0 : i32, i32
  }
  func.func @transform_25(%arg0: i32) -> (i32, i32) {
    %c0_i32 = arith.constant 0 : i32
    %c0_i32_0 = arith.constant 0 : i32
    %c0_i32_1 = arith.constant 0 : i32
    return %c0_i32, %c0_i32_0 : i32, i32
  }
  func.func @transform_26(%arg0: i32) -> (i32, i32) {
    %c0_i32 = arith.constant 0 : i32
    %c0_i32_0 = arith.constant 0 : i32
    %c0_i32_1 = arith.constant 0 : i32
    return %c0_i32, %c0_i32_0 : i32, i32
  }
  func.func @transform_27(%arg0: i32) -> (i32, i32, i32) {
    %c0_i32 = arith.constant 0 : i32
    %c0_i32_0 = arith.constant 0 : i32
    %c0_i32_1 = arith.constant 0 : i32
    return %arg0, %c0_i32, %c0_i32_0 : i32, i32, i32
  }
  func.func @transform_28(%arg0: i32) -> (i32, i32, i32) {
    %c0_i32 = arith.constant 0 : i32
    %c0_i32_0 = arith.constant 0 : i32
    %c0_i32_1 = arith.constant 0 : i32
    return %arg0, %c0_i32, %c0_i32_0 : i32, i32, i32
  }
}

</mosaic_0001>

<llo_original>
// kernel: tpu_custom_call.1
$region0: #{tpu_custom_call.1}
  #allocation0 [shape = 'u32[]', space=smem, size = 0x4, offset = 0x4, fixed_abs, tag = 'smem constant byte address 0x4 - core index']
  #allocation1 [shape = 'u32[144,128]{1,0:T(1,128)}', space=vmem, size = 0x12000, scoped, tag = 'internal scratch']
  %s0 = inlined_call_operand.hbm [shape: f32[2,8,32], index: 0, kind: input, shape index: {}]
  %s1 = inlined_call_operand.hbm [shape: f32[2,8,32], index: 1, kind: input, shape index: {}]
  %s2 = inlined_call_operand.hbm [shape: f32[2,1,8], index: 2, kind: input, shape index: {}]
  %s3 = inlined_call_operand.hbm [shape: s32[2,2,8], index: 3, kind: input, shape index: {}]
  %s4 = inlined_call_operand.vmem [shape: s32[2,8,1], index: 4, kind: input, shape index: {}]
  %s5 = inlined_call_operand.hbm [shape: f32[2,8,32], index: 5, kind: input, shape index: {}]
  %s6 = inlined_call_operand.vmem [shape: f32[2,8,1], index: 6, kind: input, shape index: {}]
  %s7 = inlined_call_operand.vmem [shape: f32[32,32], index: 7, kind: input, shape index: {}]
  %s8 = inlined_call_operand.hbm [shape: f32[1,32], index: 8, kind: input, shape index: {}]
  %s9 = inlined_call_operand.vmem [shape: f32[32,32], index: 9, kind: input, shape index: {}]
  %s10 = inlined_call_operand.hbm [shape: f32[1,32], index: 10, kind: input, shape index: {}]
  %s11 = inlined_call_operand.hbm [shape: f32[32,32], index: 11, kind: input, shape index: {}]
  %s12 = inlined_call_operand.hbm [shape: f32[1,32], index: 12, kind: input, shape index: {}]
  %s13 = inlined_call_operand.hbm [shape: f32[32,32], index: 13, kind: input, shape index: {}]
  %s14 = inlined_call_operand.hbm [shape: f32[1,32], index: 14, kind: input, shape index: {}]
  %s15 = inlined_call_operand.hbm [shape: f32[1,32], index: 15, kind: input, shape index: {}]
  %s16 = inlined_call_operand.hbm [shape: f32[1,32], index: 16, kind: input, shape index: {}]
  %s17 = inlined_call_operand.vmem [shape: f32[32,64], index: 17, kind: input, shape index: {}]
  %s18 = inlined_call_operand.vmem [shape: f32[1,64], index: 18, kind: input, shape index: {}]
  %s19 = inlined_call_operand.vmem [shape: f32[64,32], index: 19, kind: input, shape index: {}]
  %s20 = inlined_call_operand.vmem [shape: f32[1,32], index: 20, kind: input, shape index: {}]
  %s21 = inlined_call_operand.vmem [shape: f32[1,32], index: 21, kind: input, shape index: {}]
  %s22 = inlined_call_operand.vmem [shape: f32[1,32], index: 22, kind: input, shape index: {}]
  %s23 = inlined_call_operand.hbm [shape: f32[32,32], index: 23, kind: input, shape index: {}]
  %s24 = inlined_call_operand.vmem [shape: f32[1,32], index: 24, kind: input, shape index: {}]
  %s25 = inlined_call_operand.vmem [shape: f32[32,256], index: 25, kind: input, shape index: {}]
  %s26 = inlined_call_operand.vmem [shape: f32[1,256], index: 26, kind: input, shape index: {}]
  %s27 = inlined_call_operand.hbm [shape: f32[2,8,32], index: 27, kind: output, shape index: {0}]
  %s28 = inlined_call_operand.vmem [shape: f32[2,1,1], index: 28, kind: output, shape index: {1}]
  %29 = xla_tuple %s27, %s28
  %s30 = sld [smem:[#allocation0]]
  $region182: #{tpu_custom_call.1} parent=0
    _
  %s32 = ssub.s32 1, %s30
  %s33 = scalar_select 0, %s32, %s30
  $region1: #{tpu_custom_call.1} parent=0
    #allocation2 [shape = 'u8[8192]{0}', space=vmem, size = 0x2000, scoped, tag = 'input window, operand 0, single buffered']
    #allocation3 [shape = 's32[1]{0}', space=sflag, size = 0x4, scoped, tag = 'scoped memory for tpu_custom_call.1']
    #allocation4 [shape = 's32[1]{0}', space=sflag, size = 0x4, scoped, tag = 'scoped memory for tpu_custom_call.1']
    #allocation5 [shape = 'u8[8192]{0}', space=vmem, size = 0x2000, scoped, tag = 'input window, operand 1, single buffered']
    #allocation6 [shape = 's32[1]{0}', space=sflag, size = 0x4, scoped, tag = 'scoped memory for tpu_custom_call.1']
    #allocation7 [shape = 'u8[1024]{0}', space=vmem, size = 0x400, scoped, tag = 'input window, operand 2, single buffered']
    #allocation8 [shape = 'u8[2048]{0}', space=vmem, size = 0x800, scoped, tag = 'input window, operand 3, single buffered']
    #allocation9 [shape = 's32[1]{0}', space=sflag, size = 0x4, scoped, tag = 'scoped memory for tpu_custom_call.1']
    #allocation10 [shape = 'u8[8192]{0}', space=vmem, size = 0x2000, scoped, tag = 'input window, operand 5, single buffered']
    #allocation11 [shape = 'u8[512]{0}', space=vmem, size = 0x400, scoped, tag = 'input window, operand 8, single buffered']
    #allocation12 [shape = 's32[1]{0}', space=sflag, size = 0x4, scoped, tag = 'scoped memory for tpu_custom_call.1']
    #allocation13 [shape = 'u8[512]{0}', space=vmem, size = 0x400, scoped, tag = 'input window, operand 10, single buffered']
    #allocation14 [shape = 'u8[16384]{0}', space=vmem, size = 0x4000, scoped, tag = 'input window, operand 11, single buffered']
    #allocation15 [shape = 's32[1]{0}', space=sflag, size = 0x4, scoped, tag = 'scoped memory for tpu_custom_call.1']
    #allocation16 [shape = 'u8[512]{0}', space=vmem, size = 0x400, scoped, tag = 'input window, operand 12, single buffered']
    #allocation17 [shape = 'u8[16384]{0}', space=vmem, size = 0x4000, scoped, tag = 'input window, operand 13, single buffered']
    #allocation18 [shape = 's32[1]{0}', space=sflag, size = 0x4, scoped, tag = 'scoped memory for tpu_custom_call.1']
    #allocation19 [shape = 'u8[512]{0}', space=vmem, size = 0x400, scoped, tag = 'input window, operand 14, single buffered']
    #allocation20 [shape = 'u8[512]{0}', space=vmem, size = 0x400, scoped, tag = 'input window, operand 15, single buffered']
    #allocation21 [shape = 's32[1]{0}', space=sflag, size = 0x4, scoped, tag = 'scoped memory for tpu_custom_call.1']
    #allocation22 [shape = 'u8[512]{0}', space=vmem, size = 0x400, scoped, tag = 'input window, operand 16, single buffered']
    #allocation23 [shape = 'u8[16384]{0}', space=vmem, size = 0x4000, scoped, tag = 'input window, operand 23, single buffered']
    #allocation24 [shape = 's32[1]{0}', space=sflag, size = 0x4, scoped, tag = 'scoped memory for tpu_custom_call.1']
    #allocation25 [shape = 'u8[8192]{0}', space=vmem, size = 0x2000, scoped, tag = 'output window, operand 0, single buffered']
    %34 = vsyncpa [#allocation3], 0
    %35 = vsyncpa [#allocation6], 0
    %36 = vsyncpa [#allocation9], 0
    %37 = vsyncpa [#allocation12], 0
    %38 = vsyncpa [#allocation15], 0
    %39 = vsyncpa [#allocation18], 0
    %40 = vsyncpa [#allocation21], 0
    %41 = vsyncpa [#allocation24], 0
    %42 = vsyncpa [#allocation4], 0
    // Predicated region
    $region2: #{tpu_custom_call.1} parent=1 // pred_check
      _
    $region3: #{tpu_custom_call.1} parent=1 // pred_check_branch
      %44 = sbr.rel (0) target = $region5
    $region4: #{tpu_custom_call.1} parent=1 // pred_region
      %s46 = ssub.s32 256, 256
      %47 = vsyncadd [#allocation3], %s46
      %s48 = sshll.u32 [#allocation2], 4
      %s49 = int_to_ptr.vmem [resolvable:$true] %s48
      %54 = dma.hbm_to_vmem [thread:$0]  %s0, 256, %s49, [#allocation3], 128, 128, 8
    $region5: #{tpu_custom_call.1} parent=1 // pred_fallthru
      _
    // Predicated region
    $region6: #{tpu_custom_call.1} parent=1 // pred_check
      _
    $region7: #{tpu_custom_call.1} parent=1 // pred_check_branch
      %56 = sbr.rel (0) target = $region9
    $region8: #{tpu_custom_call.1} parent=1 // pred_region
      %s58 = ssub.s32 256, 256
      %59 = vsyncadd [#allocation6], %s58
      %s60 = sshll.u32 [#allocation5], 4
      %s61 = int_to_ptr.vmem [resolvable:$true] %s60
      %66 = dma.hbm_to_vmem [thread:$0]  %s1, 256, %s61, [#allocation6], 128, 128, 8
    $region9: #{tpu_custom_call.1} parent=1 // pred_fallthru
      _
    // Predicated region
    $region10: #{tpu_custom_call.1} parent=1 // pred_check
      _
    $region11: #{tpu_custom_call.1} parent=1 // pred_check_branch
      %68 = sbr.rel (0) target = $region13
    $region12: #{tpu_custom_call.1} parent=1 // pred_region
      %s70 = ssub.s32 32, 32
      %71 = vsyncadd [#allocation6], %s70
      %s72 = sshll.u32 [#allocation7], 4
      %s73 = int_to_ptr.vmem [resolvable:$true] %s72
      %78 = dma.hbm_to_vmem [thread:$0]  %s2, 32, %s73, [#allocation6], 16, 16, 1
    $region13: #{tpu_custom_call.1} parent=1 // pred_fallthru
      _
    // Predicated region
    $region14: #{tpu_custom_call.1} parent=1 // pred_check
      _
    $region15: #{tpu_custom_call.1} parent=1 // pred_check_branch
      %80 = sbr.rel (0) target = $region17
    $region16: #{tpu_custom_call.1} parent=1 // pred_region
      %s82 = ssub.s32 64, 64
      %83 = vsyncadd [#allocation9], %s82
      %s84 = sshll.u32 [#allocation8], 4
      %s85 = int_to_ptr.vmem [resolvable:$true] %s84
      %90 = dma.hbm_to_vmem [thread:$0]  %s3, 64, %s85, [#allocation9], 32, 32, 2
    $region17: #{tpu_custom_call.1} parent=1 // pred_fallthru
      _
    // Predicated region
    $region18: #{tpu_custom_call.1} parent=1 // pred_check
      _
    $region19: #{tpu_custom_call.1} parent=1 // pred_check_branch
      %92 = sbr.rel (0) target = $region21
    $region20: #{tpu_custom_call.1} parent=1 // pred_region
      _
    $region21: #{tpu_custom_call.1} parent=1 // pred_fallthru
      _
    // Predicated region
    $region22: #{tpu_custom_call.1} parent=1 // pred_check
      _
    $region23: #{tpu_custom_call.1} parent=1 // pred_check_branch
      %94 = sbr.rel (0) target = $region25
    $region24: #{tpu_custom_call.1} parent=1 // pred_region
      %s96 = ssub.s32 256, 256
      %97 = vsyncadd [#allocation9], %s96
      %s98 = sshll.u32 [#allocation10], 4
      %s99 = int_to_ptr.vmem [resolvable:$true] %s98
      %104 = dma.hbm_to_vmem [thread:$0]  %s5, 256, %s99, [#allocation9], 128, 128, 8
    $region25: #{tpu_custom_call.1} parent=1 // pred_fallthru
      _
    // Predicated region
    $region26: #{tpu_custom_call.1} parent=1 // pred_check
      _
    $region27: #{tpu_custom_call.1} parent=1 // pred_check_branch
      %106 = sbr.rel (0) target = $region29
    $region28: #{tpu_custom_call.1} parent=1 // pred_region
      _
    $region29: #{tpu_custom_call.1} parent=1 // pred_fallthru
      _
    // Predicated region
    $region30: #{tpu_custom_call.1} parent=1 // pred_check
      _
    $region31: #{tpu_custom_call.1} parent=1 // pred_check_branch
      %108 = sbr.rel (0) target = $region33
    $region32: #{tpu_custom_call.1} parent=1 // pred_region
      _
    $region33: #{tpu_custom_call.1} parent=1 // pred_fallthru
      _
    // Predicated region
    $region34: #{tpu_custom_call.1} parent=1 // pred_check
      _
    $region35: #{tpu_custom_call.1} parent=1 // pred_check_branch
      %110 = sbr.rel (0) target = $region37
    $region36: #{tpu_custom_call.1} parent=1 // pred_region
      %s112 = ssub.s32 16, 16
      %113 = vsyncadd [#allocation12], %s112
      %s115 = sshll.u32 [#allocation11], 4
      %s116 = int_to_ptr.vmem [resolvable:$true] %s115
      %118 = dma.hbm_to_vmem [thread:$0]  %s8, 16, %s116, [#allocation12]
    $region37: #{tpu_custom_call.1} parent=1 // pred_fallthru
      _
    // Predicated region
    $region38: #{tpu_custom_call.1} parent=1 // pred_check
      _
    $region39: #{tpu_custom_call.1} parent=1 // pred_check_branch
      %120 = sbr.rel (0) target = $region41
    $region40: #{tpu_custom_call.1} parent=1 // pred_region
      _
    $region41: #{tpu_custom_call.1} parent=1 // pred_fallthru
      _
    // Predicated region
    $region42: #{tpu_custom_call.1} parent=1 // pred_check
      _
    $region43: #{tpu_custom_call.1} parent=1 // pred_check_branch
      %122 = sbr.rel (0) target = $region45
    $region44: #{tpu_custom_call.1} parent=1 // pred_region
      %s124 = ssub.s32 16, 16
      %125 = vsyncadd [#allocation12], %s124
      %s127 = sshll.u32 [#allocation13], 4
      %s128 = int_to_ptr.vmem [resolvable:$true] %s127
      %130 = dma.hbm_to_vmem [thread:$0]  %s10, 16, %s128, [#allocation12]
    $region45: #{tpu_custom_call.1} parent=1 // pred_fallthru
      _
    // Predicated region
    $region46: #{tpu_custom_call.1} parent=1 // pred_check
      _
    $region47: #{tpu_custom_call.1} parent=1 // pred_check_branch
      %132 = sbr.rel (0) target = $region49
    $region48: #{tpu_custom_call.1} parent=1 // pred_region
      %s134 = ssub.s32 512, 512
      %135 = vsyncadd [#allocation15], %s134
      %s136 = sshll.u32 [#allocation14], 4
      %s137 = int_to_ptr.vmem [resolvable:$true] %s136
      %142 = dma.hbm_to_vmem [thread:$0]  %s11, 512, %s137, [#allocation15], 128, 128, 8
    $region49: #{tpu_custom_call.1} parent=1 // pred_fallthru
      _
    // Predicated region
    $region50: #{tpu_custom_call.1} parent=1 // pred_check
      _
    $region51: #{tpu_custom_call.1} parent=1 // pred_check_branch
      %144 = sbr.rel (0) target = $region53
    $region52: #{tpu_custom_call.1} parent=1 // pred_region
      %s146 = ssub.s32 16, 16
      %147 = vsyncadd [#allocation15], %s146
      %s149 = sshll.u32 [#allocation16], 4
      %s150 = int_to_ptr.vmem [resolvable:$true] %s149
      %152 = dma.hbm_to_vmem [thread:$0]  %s12, 16, %s150, [#allocation15]
    $region53: #{tpu_custom_call.1} parent=1 // pred_fallthru
      _
    // Predicated region
    $region54: #{tpu_custom_call.1} parent=1 // pred_check
      _
    $region55: #{tpu_custom_call.1} parent=1 // pred_check_branch
      %154 = sbr.rel (0) target = $region57
    $region56: #{tpu_custom_call.1} parent=1 // pred_region
      %s156 = ssub.s32 512, 512
      %157 = vsyncadd [#allocation18], %s156
      %s158 = sshll.u32 [#allocation17], 4
      %s159 = int_to_ptr.vmem [resolvable:$true] %s158
      %164 = dma.hbm_to_vmem [thread:$0]  %s13, 512, %s159, [#allocation18], 128, 128, 8
    $region57: #{tpu_custom_call.1} parent=1 // pred_fallthru
      _
    // Predicated region
    $region58: #{tpu_custom_call.1} parent=1 // pred_check
      _
    $region59: #{tpu_custom_call.1} parent=1 // pred_check_branch
      %166 = sbr.rel (0) target = $region61
    $region60: #{tpu_custom_call.1} parent=1 // pred_region
      %s168 = ssub.s32 16, 16
      %169 = vsyncadd [#allocation18], %s168
      %s171 = sshll.u32 [#allocation19], 4
      %s172 = int_to_ptr.vmem [resolvable:$true] %s171
      %174 = dma.hbm_to_vmem [thread:$0]  %s14, 16, %s172, [#allocation18]
    $region61: #{tpu_custom_call.1} parent=1 // pred_fallthru
      _
    // Predicated region
    $region62: #{tpu_custom_call.1} parent=1 // pred_check
      _
    $region63: #{tpu_custom_call.1} parent=1 // pred_check_branch
      %176 = sbr.rel (0) target = $region65
    $region64: #{tpu_custom_call.1} parent=1 // pred_region
      %s178 = ssub.s32 16, 16
      %179 = vsyncadd [#allocation21], %s178
      %s181 = sshll.u32 [#allocation20], 4
      %s182 = int_to_ptr.vmem [resolvable:$true] %s181
      %184 = dma.hbm_to_vmem [thread:$0]  %s15, 16, %s182, [#allocation21]
    $region65: #{tpu_custom_call.1} parent=1 // pred_fallthru
      _
    // Predicated region
    $region66: #{tpu_custom_call.1} parent=1 // pred_check
      _
    $region67: #{tpu_custom_call.1} parent=1 // pred_check_branch
      %186 = sbr.rel (0) target = $region69
    $region68: #{tpu_custom_call.1} parent=1 // pred_region
      %s188 = ssub.s32 16, 16
      %189 = vsyncadd [#allocation21], %s188
      %s191 = sshll.u32 [#allocation22], 4
      %s192 = int_to_ptr.vmem [resolvable:$true] %s191
      %194 = dma.hbm_to_vmem [thread:$0]  %s16, 16, %s192, [#allocation21]
    $region69: #{tpu_custom_call.1} parent=1 // pred_fallthru
      _
    // Predicated region
    $region70: #{tpu_custom_call.1} parent=1 // pred_check
      _
    $region71: #{tpu_custom_call.1} parent=1 // pred_check_branch
      %196 = sbr.rel (0) target = $region73
    $region72: #{tpu_custom_call.1} parent=1 // pred_region
      _
    $region73: #{tpu_custom_call.1} parent=1 // pred_fallthru
      _
    // Predicated region
    $region74: #{tpu_custom_call.1} parent=1 // pred_check
      _
    $region75: #{tpu_custom_call.1} parent=1 // pred_check_branch
      %198 = sbr.rel (0) target = $region77
    $region76: #{tpu_custom_call.1} parent=1 // pred_region
      _
    $region77: #{tpu_custom_call.1} parent=1 // pred_fallthru
      _
    // Predicated region
    $region78: #{tpu_custom_call.1} parent=1 // pred_check
      _
    $region79: #{tpu_custom_call.1} parent=1 // pred_check_branch
      %200 = sbr.rel (0) target = $region81
    $region80: #{tpu_custom_call.1} parent=1 // pred_region
      _
    $region81: #{tpu_custom_call.1} parent=1 // pred_fallthru
      _
    // Predicated region
    $region82: #{tpu_custom_call.1} parent=1 // pred_check
      _
    $region83: #{tpu_custom_call.1} parent=1 // pred_check_branch
      %202 = sbr.rel (0) target = $region85
    $region84: #{tpu_custom_call.1} parent=1 // pred_region
      _
    $region85: #{tpu_custom_call.1} parent=1 // pred_fallthru
      _
    // Predicated region
    $region86: #{tpu_custom_call.1} parent=1 // pred_check
      _
    $region87: #{tpu_custom_call.1} parent=1 // pred_check_branch
      %204 = sbr.rel (0) target = $region89
    $region88: #{tpu_custom_call.1} parent=1 // pred_region
      _
    $region89: #{tpu_custom_call.1} parent=1 // pred_fallthru
      _
    // Predicated region
    $region90: #{tpu_custom_call.1} parent=1 // pred_check
      _
    $region91: #{tpu_custom_call.1} parent=1 // pred_check_branch
      %206 = sbr.rel (0) target = $region93
    $region92: #{tpu_custom_call.1} parent=1 // pred_region
      _
    $region93: #{tpu_custom_call.1} parent=1 // pred_fallthru
      _
    // Predicated region
    $region94: #{tpu_custom_call.1} parent=1 // pred_check
      _
    $region95: #{tpu_custom_call.1} parent=1 // pred_check_branch
      %208 = sbr.rel (0) target = $region97
    $region96: #{tpu_custom_call.1} parent=1 // pred_region
      %s210 = ssub.s32 512, 512
      %211 = vsyncadd [#allocation24], %s210
      %s212 = sshll.u32 [#allocation23], 4
      %s213 = int_to_ptr.vmem [resolvable:$true] %s212
      %218 = dma.hbm_to_vmem [thread:$0]  %s23, 512, %s213, [#allocation24], 128, 128, 8
    $region97: #{tpu_custom_call.1} parent=1 // pred_fallthru
      _
    // Predicated region
    $region98: #{tpu_custom_call.1} parent=1 // pred_check
      _
    $region99: #{tpu_custom_call.1} parent=1 // pred_check_branch
      %220 = sbr.rel (0) target = $region101
    $region100: #{tpu_custom_call.1} parent=1 // pred_region
      _
    $region101: #{tpu_custom_call.1} parent=1 // pred_fallthru
      _
    // Predicated region
    $region102: #{tpu_custom_call.1} parent=1 // pred_check
      _
    $region103: #{tpu_custom_call.1} parent=1 // pred_check_branch
      %222 = sbr.rel (0) target = $region105
    $region104: #{tpu_custom_call.1} parent=1 // pred_region
      _
    $region105: #{tpu_custom_call.1} parent=1 // pred_fallthru
      _
    // Predicated region
    $region106: #{tpu_custom_call.1} parent=1 // pred_check
      _
    $region107: #{tpu_custom_call.1} parent=1 // pred_check_branch
      %224 = sbr.rel (0) target = $region109
    $region108: #{tpu_custom_call.1} parent=1 // pred_region
      _
    $region109: #{tpu_custom_call.1} parent=1 // pred_fallthru
      _
    // Predicated region
    $region110: #{tpu_custom_call.1} parent=1 // pred_check
      _
    $region111: #{tpu_custom_call.1} parent=1 // pred_check_branch
      %226 = sbr.rel (0) target = $region113
    $region112: #{tpu_custom_call.1} parent=1 // pred_region
      %227 = dma.done [#allocation3], 256
    $region113: #{tpu_custom_call.1} parent=1 // pred_fallthru
      _
    // Predicated region
    $region114: #{tpu_custom_call.1} parent=1 // pred_check
      _
    $region115: #{tpu_custom_call.1} parent=1 // pred_check_branch
      %229 = sbr.rel (0) target = $region117
    $region116: #{tpu_custom_call.1} parent=1 // pred_region
      %230 = dma.done [#allocation6], 256
    $region117: #{tpu_custom_call.1} parent=1 // pred_fallthru
      _
    // Predicated region
    $region118: #{tpu_custom_call.1} parent=1 // pred_check
      _
    $region119: #{tpu_custom_call.1} parent=1 // pred_check_branch
      %232 = sbr.rel (0) target = $region121
    $region120: #{tpu_custom_call.1} parent=1 // pred_region
      %233 = dma.done [#allocation6], 32
    $region121: #{tpu_custom_call.1} parent=1 // pred_fallthru
      _
    // Predicated region
    $region122: #{tpu_custom_call.1} parent=1 // pred_check
      _
    $region123: #{tpu_custom_call.1} parent=1 // pred_check_branch
      %235 = sbr.rel (0) target = $region125
    $region124: #{tpu_custom_call.1} parent=1 // pred_region
      %236 = dma.done [#allocation9], 64
    $region125: #{tpu_custom_call.1} parent=1 // pred_fallthru
      _
    // Predicated region
    $region126: #{tpu_custom_call.1} parent=1 // pred_check
      _
    $region127: #{tpu_custom_call.1} parent=1 // pred_check_branch
      %238 = sbr.rel (0) target = $region129
    $region128: #{tpu_custom_call.1} parent=1 // pred_region
      %239 = dma.done [#allocation9], 256
    $region129: #{tpu_custom_call.1} parent=1 // pred_fallthru
      _
    // Predicated region
    $region130: #{tpu_custom_call.1} parent=1 // pred_check
      _
    $region131: #{tpu_custom_call.1} parent=1 // pred_check_branch
      %241 = sbr.rel (0) target = $region133
    $region132: #{tpu_custom_call.1} parent=1 // pred_region
      %242 = dma.done [#allocation12], 16
    $region133: #{tpu_custom_call.1} parent=1 // pred_fallthru
      _
    // Predicated region
    $region134: #{tpu_custom_call.1} parent=1 // pred_check
      _
    $region135: #{tpu_custom_call.1} parent=1 // pred_check_branch
      %244 = sbr.rel (0) target = $region137
    $region136: #{tpu_custom_call.1} parent=1 // pred_region
      %245 = dma.done [#allocation12], 16
    $region137: #{tpu_custom_call.1} parent=1 // pred_fallthru
      _
    // Predicated region
    $region138: #{tpu_custom_call.1} parent=1 // pred_check
      _
    $region139: #{tpu_custom_call.1} parent=1 // pred_check_branch
      %247 = sbr.rel (0) target = $region141
    $region140: #{tpu_custom_call.1} parent=1 // pred_region
      %248 = dma.done [#allocation15], 512
    $region141: #{tpu_custom_call.1} parent=1 // pred_fallthru
      _
    // Predicated region
    $region142: #{tpu_custom_call.1} parent=1 // pred_check
      _
    $region143: #{tpu_custom_call.1} parent=1 // pred_check_branch
      %250 = sbr.rel (0) target = $region145
    $region144: #{tpu_custom_call.1} parent=1 // pred_region
      %251 = dma.done [#allocation15], 16
    $region145: #{tpu_custom_call.1} parent=1 // pred_fallthru
      _
    // Predicated region
    $region146: #{tpu_custom_call.1} parent=1 // pred_check
      _
    $region147: #{tpu_custom_call.1} parent=1 // pred_check_branch
      %253 = sbr.rel (0) target = $region149
    $region148: #{tpu_custom_call.1} parent=1 // pred_region
      %254 = dma.done [#allocation18], 512
    $region149: #{tpu_custom_call.1} parent=1 // pred_fallthru
      _
    // Predicated region
    $region150: #{tpu_custom_call.1} parent=1 // pred_check
      _
    $region151: #{tpu_custom_call.1} parent=1 // pred_check_branch
      %256 = sbr.rel (0) target = $region153
    $region152: #{tpu_custom_call.1} parent=1 // pred_region
      %257 = dma.done [#allocation18], 16
    $region153: #{tpu_custom_call.1} parent=1 // pred_fallthru
      _
    // Predicated region
    $region154: #{tpu_custom_call.1} parent=1 // pred_check
      _
    $region155: #{tpu_custom_call.1} parent=1 // pred_check_branch
      %259 = sbr.rel (0) target = $region157
    $region156: #{tpu_custom_call.1} parent=1 // pred_region
      %260 = dma.done [#allocation21], 16
    $region157: #{tpu_custom_call.1} parent=1 // pred_fallthru
      _
    // Predicated region
    $region158: #{tpu_custom_call.1} parent=1 // pred_check
      _
    $region159: #{tpu_custom_call.1} parent=1 // pred_check_branch
      %262 = sbr.rel (0) target = $region161
    $region160: #{tpu_custom_call.1} parent=1 // pred_region
      %263 = dma.done [#allocation21], 16
    $region161: #{tpu_custom_call.1} parent=1 // pred_fallthru
      _
    // Predicated region
    $region162: #{tpu_custom_call.1} parent=1 // pred_check
      _
    $region163: #{tpu_custom_call.1} parent=1 // pred_check_branch
      %265 = sbr.rel (0) target = $region165
    $region164: #{tpu_custom_call.1} parent=1 // pred_region
      %266 = dma.done [#allocation24], 512
    $region165: #{tpu_custom_call.1} parent=1 // pred_fallthru
      _
    %v267 = vld [vmem:[#allocation2] sm:$0xff]
    %v268 = vld [vmem:[#allocation2 + $0x8] sm:$0xff]
    %v269 = vld [vmem:[#allocation5] sm:$0xff]
    %v270 = vld [vmem:[#allocation5 + $0x8] sm:$0xff]
    %v271 = vld [vmem:[#allocation7] sm:$0x1]
    %v272 = vld [vmem:[#allocation7 + $0x1] sm:$0x1]
    %v273 = vld [vmem:[%s7] sm:$0xff]
    %v274 = vld [vmem:[%s7 + $0x8] sm:$0xff]
    %v275 = vld [vmem:[%s7 + $0x10] sm:$0xff]
    %v276 = vld [vmem:[%s7 + $0x18] sm:$0xff]
    %v277 = vld [vmem:[#allocation11] sm:$0x1]
    %v279 = vlaneseq
    %v280 = vshrl.u32 %v279, 7
    %v281 = vsub.s32 0, %v280
    %v282 = vrot.slane %v277, %v281
    %vm284 = vcmask 261120
    %v286 = vsel %vm284, %v267, 0
    %v289 = vsel %vm284, %v268, 0
    %291 = vmatprep.subr.mxu0 0.0
    %292 = vmatpush1.msra.mxu0 %v273
    %293 = vmatprep.subr.mxu0 0.0
    %294 = vmatpush1.msra.mxu0 %v274
    %295 = vmatprep.subr.mxu0 0.0
    %296 = vmatpush1.msra.mxu0 %v275
    %297 = vmatprep.subr.mxu0 0.0
    %298 = vmatpush1.msra.mxu0 %v276
    %299 = vmatprep.subr.mxu0 0.0
    %300 = vmatpush1.msra.mxu0 0.0
    %301 = vmatprep.subr.mxu0 0.0
    %302 = vmatpush1.msra.mxu0 0.0
    %303 = vmatprep.subr.mxu0 0.0
    %304 = vmatpush1.msra.mxu0 0.0
    %305 = vmatprep.subr.mxu0 0.0
    %306 = vmatpush1.msra.mxu0 0.0
    %307 = vmatprep.subr.mxu0 0.0
    %308 = vmatpush1.msra.mxu0 0.0
    %309 = vmatprep.subr.mxu0 0.0
    %310 = vmatpush1.msra.mxu0 0.0
    %311 = vmatprep.subr.mxu0 0.0
    %312 = vmatpush1.msra.mxu0 0.0
    %313 = vmatprep.subr.mxu0 0.0
    %314 = vmatpush1.msra.mxu0 0.0
    %315 = vmatprep.subr.mxu0 0.0
    %316 = vmatpush1.msra.mxu0 0.0
    %317 = vmatprep.subr.mxu0 0.0
    %318 = vmatpush1.msra.mxu0 0.0
    %319 = vmatprep.subr.mxu0 0.0
    %320 = vmatpush1.msra.mxu0 0.0
    %321 = vmatprep.subr.mxu0 0.0
    %322 = vmatpush1.msra.mxu0 0.0
    %323 = vmatprep.subr.mxu0 0.0
    %324 = vmatpush1.msra.mxu0 0.0
    %325 = vmatprep.subr.mxu0 0.0
    %326 = vmatpush1.msra.mxu0 0.0
    %327 = vmatprep.subr.mxu0 0.0
    %328 = vmatpush1.msra.mxu0 0.0
    %329 = vmatprep.subr.mxu0 0.0
    %330 = vmatpush1.msra.mxu0 0.0
    %331 = vmatprep.subr.mxu0 0.0
    %332 = vmatpush1.msra.mxu0 0.0
    %333 = vmatprep.subr.mxu0 0.0
    %334 = vmatpush1.msra.mxu0 0.0
    %335 = vmatprep.subr.mxu0 0.0
    %336 = vmatpush1.msra.mxu0 0.0
    %337 = vmatprep.subr.mxu0 0.0
    %338 = vmatpush1.msra.mxu0 0.0
    %339 = vmatprep.subr.mxu0 0.0
    %340 = vmatpush1.msra.mxu0 0.0
    %341 = vmatprep.subr.mxu0 0.0
    %342 = vmatpush1.msra.mxu0 0.0
    %343 = vmatprep.subr.mxu0 0.0
    %344 = vmatpush1.msra.mxu0 0.0
    %345 = vmatprep.subr.mxu0 0.0
    %346 = vmatpush1.msra.mxu0 0.0
    %347 = vmatprep.subr.mxu0 0.0
    %348 = vmatpush1.msra.mxu0 0.0
    %349 = vmatprep.subr.mxu0 0.0
    %350 = vmatpush1.msra.mxu0 0.0
    %351 = vmatprep.subr.mxu0 0.0
    %352 = vmatpush1.msra.mxu0 0.0
    %353 = vmatprep.subr.mxu0 0.0
    %354 = vmatpush1.msra.mxu0 0.0
    %355 = vmatprep.mubr.f32.mxu0 0.0
    %356 = vmatmul.mubr.f32.gmra.mrb[0].mxu0 %v286
    %v357 = vpop.f32.mrb[0].mxu0
    %v358 = vadd.f32 %v282, %v357
    %v359 = vpop.f32.mrb[0].mxu0
    %360 = vmatprep.mubr.f32.mxu0 0.0
    %361 = vmatmul.mubr.f32.gmra.mrb[0].mxu0 %v289
    %v362 = vpop.f32.mrb[0].mxu0
    %v363 = vadd.f32 %v282, %v362
    %v364 = vpop.f32.mrb[0].mxu0
    %365 = vdwg.mxu0
    %v366 = vmul.f32 %v358, 0.17677669
    %v367 = vmul.f32 %v363, 0.17677669
    %v368 = vld [vmem:[%s9] sm:$0xff]
    %v369 = vld [vmem:[%s9 + $0x8] sm:$0xff]
    %v370 = vld [vmem:[%s9 + $0x10] sm:$0xff]
    %v371 = vld [vmem:[%s9 + $0x18] sm:$0xff]
    %v372 = vld [vmem:[#allocation13] sm:$0x1]
    %v374 = vlaneseq
    %v375 = vshrl.u32 %v374, 7
    %v376 = vsub.s32 0, %v375
    %v377 = vrot.slane %v372, %v376
    %v380 = vsel %vm284, %v269, 0
    %v383 = vsel %vm284, %v270, 0
    %385 = vmatprep.subr.mxu0 0.0
    %386 = vmatpush1.msra.mxu0 %v368
    %387 = vmatprep.subr.mxu0 0.0
    %388 = vmatpush1.msra.mxu0 %v369
    %389 = vmatprep.subr.mxu0 0.0
    %390 = vmatpush1.msra.mxu0 %v370
    %391 = vmatprep.subr.mxu0 0.0
    %392 = vmatpush1.msra.mxu0 %v371
    %393 = vmatprep.subr.mxu0 0.0
    %394 = vmatpush1.msra.mxu0 0.0
    %395 = vmatprep.subr.mxu0 0.0
    %396 = vmatpush1.msra.mxu0 0.0
    %397 = vmatprep.subr.mxu0 0.0
    %398 = vmatpush1.msra.mxu0 0.0
    %399 = vmatprep.subr.mxu0 0.0
    %400 = vmatpush1.msra.mxu0 0.0
    %401 = vmatprep.subr.mxu0 0.0
    %402 = vmatpush1.msra.mxu0 0.0
    %403 = vmatprep.subr.mxu0 0.0
    %404 = vmatpush1.msra.mxu0 0.0
    %405 = vmatprep.subr.mxu0 0.0
    %406 = vmatpush1.msra.mxu0 0.0
    %407 = vmatprep.subr.mxu0 0.0
    %408 = vmatpush1.msra.mxu0 0.0
    %409 = vmatprep.subr.mxu0 0.0
    %410 = vmatpush1.msra.mxu0 0.0
    %411 = vmatprep.subr.mxu0 0.0
    %412 = vmatpush1.msra.mxu0 0.0
    %413 = vmatprep.subr.mxu0 0.0
    %414 = vmatpush1.msra.mxu0 0.0
    %415 = vmatprep.subr.mxu0 0.0
    %416 = vmatpush1.msra.mxu0 0.0
    %417 = vmatprep.subr.mxu0 0.0
    %418 = vmatpush1.msra.mxu0 0.0
    %419 = vmatprep.subr.mxu0 0.0
    %420 = vmatpush1.msra.mxu0 0.0
    %421 = vmatprep.subr.mxu0 0.0
    %422 = vmatpush1.msra.mxu0 0.0
    %423 = vmatprep.subr.mxu0 0.0
    %424 = vmatpush1.msra.mxu0 0.0
    %425 = vmatprep.subr.mxu0 0.0
    %426 = vmatpush1.msra.mxu0 0.0
    %427 = vmatprep.subr.mxu0 0.0
    %428 = vmatpush1.msra.mxu0 0.0
    %429 = vmatprep.subr.mxu0 0.0
    %430 = vmatpush1.msra.mxu0 0.0
    %431 = vmatprep.subr.mxu0 0.0
    %432 = vmatpush1.msra.mxu0 0.0
    %433 = vmatprep.subr.mxu0 0.0
    %434 = vmatpush1.msra.mxu0 0.0
    %435 = vmatprep.subr.mxu0 0.0
    %436 = vmatpush1.msra.mxu0 0.0
    %437 = vmatprep.subr.mxu0 0.0
    %438 = vmatpush1.msra.mxu0 0.0
    %439 = vmatprep.subr.mxu0 0.0
    %440 = vmatpush1.msra.mxu0 0.0
    %441 = vmatprep.subr.mxu0 0.0
    %442 = vmatpush1.msra.mxu0 0.0
    %443 = vmatprep.subr.mxu0 0.0
    %444 = vmatpush1.msra.mxu0 0.0
    %445 = vmatprep.subr.mxu0 0.0
    %446 = vmatpush1.msra.mxu0 0.0
    %447 = vmatprep.subr.mxu0 0.0
    %448 = vmatpush1.msra.mxu0 0.0
    %449 = vmatprep.mubr.f32.mxu0 0.0
    %450 = vmatmul.mubr.f32.gmra.mrb[0].mxu0 %v380
    %v451 = vpop.f32.mrb[0].mxu0
    %v452 = vadd.f32 %v377, %v451
    %v453 = vpop.f32.mrb[0].mxu0
    %454 = vmatprep.mubr.f32.mxu0 0.0
    %455 = vmatmul.mubr.f32.gmra.mrb[0].mxu0 %v383
    %v456 = vpop.f32.mrb[0].mxu0
    %v457 = vadd.f32 %v377, %v456
    %v458 = vpop.f32.mrb[0].mxu0
    %459 = vdwg.mxu0
    %v460 = vld [vmem:[#allocation14] sm:$0xff]
    %v461 = vld [vmem:[#allocation14 + $0x8] sm:$0xff]
    %v462 = vld [vmem:[#allocation14 + $0x10] sm:$0xff]
    %v463 = vld [vmem:[#allocation14 + $0x18] sm:$0xff]
    %v464 = vld [vmem:[#allocation16] sm:$0x1]
    %v466 = vlaneseq
    %v467 = vshrl.u32 %v466, 7
    %v468 = vsub.s32 0, %v467
    %v469 = vrot.slane %v464, %v468
    %471 = vmatprep.subr.mxu0 0.0
    %472 = vmatpush1.msra.mxu0 %v460
    %473 = vmatprep.subr.mxu0 0.0
    %474 = vmatpush1.msra.mxu0 %v461
    %475 = vmatprep.subr.mxu0 0.0
    %476 = vmatpush1.msra.mxu0 %v462
    %477 = vmatprep.subr.mxu0 0.0
    %478 = vmatpush1.msra.mxu0 %v463
    %479 = vmatprep.subr.mxu0 0.0
    %480 = vmatpush1.msra.mxu0 0.0
    %481 = vmatprep.subr.mxu0 0.0
    %482 = vmatpush1.msra.mxu0 0.0
    %483 = vmatprep.subr.mxu0 0.0
    %484 = vmatpush1.msra.mxu0 0.0
    %485 = vmatprep.subr.mxu0 0.0
    %486 = vmatpush1.msra.mxu0 0.0
    %487 = vmatprep.subr.mxu0 0.0
    %488 = vmatpush1.msra.mxu0 0.0
    %489 = vmatprep.subr.mxu0 0.0
    %490 = vmatpush1.msra.mxu0 0.0
    %491 = vmatprep.subr.mxu0 0.0
    %492 = vmatpush1.msra.mxu0 0.0
    %493 = vmatprep.subr.mxu0 0.0
    %494 = vmatpush1.msra.mxu0 0.0
    %495 = vmatprep.subr.mxu0 0.0
    %496 = vmatpush1.msra.mxu0 0.0
    %497 = vmatprep.subr.mxu0 0.0
    %498 = vmatpush1.msra.mxu0 0.0
    %499 = vmatprep.subr.mxu0 0.0
    %500 = vmatpush1.msra.mxu0 0.0
    %501 = vmatprep.subr.mxu0 0.0
    %502 = vmatpush1.msra.mxu0 0.0
    %503 = vmatprep.subr.mxu0 0.0
    %504 = vmatpush1.msra.mxu0 0.0
    %505 = vmatprep.subr.mxu0 0.0
    %506 = vmatpush1.msra.mxu0 0.0
    %507 = vmatprep.subr.mxu0 0.0
    %508 = vmatpush1.msra.mxu0 0.0
    %509 = vmatprep.subr.mxu0 0.0
    %510 = vmatpush1.msra.mxu0 0.0
    %511 = vmatprep.subr.mxu0 0.0
    %512 = vmatpush1.msra.mxu0 0.0
    %513 = vmatprep.subr.mxu0 0.0
    %514 = vmatpush1.msra.mxu0 0.0
    %515 = vmatprep.subr.mxu0 0.0
    %516 = vmatpush1.msra.mxu0 0.0
    %517 = vmatprep.subr.mxu0 0.0
    %518 = vmatpush1.msra.mxu0 0.0
    %519 = vmatprep.subr.mxu0 0.0
    %520 = vmatpush1.msra.mxu0 0.0
    %521 = vmatprep.subr.mxu0 0.0
    %522 = vmatpush1.msra.mxu0 0.0
    %523 = vmatprep.subr.mxu0 0.0
    %524 = vmatpush1.msra.mxu0 0.0
    %525 = vmatprep.subr.mxu0 0.0
    %526 = vmatpush1.msra.mxu0 0.0
    %527 = vmatprep.subr.mxu0 0.0
    %528 = vmatpush1.msra.mxu0 0.0
    %529 = vmatprep.subr.mxu0 0.0
    %530 = vmatpush1.msra.mxu0 0.0
    %531 = vmatprep.subr.mxu0 0.0
    %532 = vmatpush1.msra.mxu0 0.0
    %533 = vmatprep.subr.mxu0 0.0
    %534 = vmatpush1.msra.mxu0 0.0
    %535 = vmatprep.mubr.f32.mxu0 0.0
    %536 = vmatmul.mubr.f32.gmra.mrb[0].mxu0 %v380
    %v537 = vpop.f32.mrb[0].mxu0
    %v538 = vadd.f32 %v469, %v537
    %v539 = vpop.f32.mrb[0].mxu0
    %540 = vmatprep.mubr.f32.mxu0 0.0
    %541 = vmatmul.mubr.f32.gmra.mrb[0].mxu0 %v383
    %v542 = vpop.f32.mrb[0].mxu0
    %v543 = vadd.f32 %v469, %v542
    %v544 = vpop.f32.mrb[0].mxu0
    %545 = vdwg.mxu0
    %v547 = vsel %vm284, %v366, 0
    %v550 = vsel %vm284, %v452, 0
    %552 = vmatprep.subr.mxu0 0.0
    %553 = vmatpush1.xpose.msra.mxu0 %v550
    %554 = vmatprep.subr.mxu0 0.0
    %555 = vmatpush1.xpose.msra.mxu0 0.0
    %556 = vmatprep.subr.mxu0 0.0
    %557 = vmatpush1.xpose.msra.mxu0 0.0
    %558 = vmatprep.subr.mxu0 0.0
    %559 = vmatpush1.xpose.msra.mxu0 0.0
    %560 = vmatprep.subr.mxu0 0.0
    %561 = vmatpush1.xpose.msra.mxu0 0.0
    %562 = vmatprep.subr.mxu0 0.0
    %563 = vmatpush1.xpose.msra.mxu0 0.0
    %564 = vmatprep.subr.mxu0 0.0
    %565 = vmatpush1.xpose.msra.mxu0 0.0
    %566 = vmatprep.subr.mxu0 0.0
    %567 = vmatpush1.xpose.msra.mxu0 0.0
    %568 = vmatprep.subr.mxu0 0.0
    %569 = vmatpush1.xpose.msra.mxu0 0.0
    %570 = vmatprep.subr.mxu0 0.0
    %571 = vmatpush1.xpose.msra.mxu0 0.0
    %572 = vmatprep.subr.mxu0 0.0
    %573 = vmatpush1.xpose.msra.mxu0 0.0
    %574 = vmatprep.subr.mxu0 0.0
    %575 = vmatpush1.xpose.msra.mxu0 0.0
    %576 = vmatprep.subr.mxu0 0.0
    %577 = vmatpush1.xpose.msra.mxu0 0.0
    %578 = vmatprep.subr.mxu0 0.0
    %579 = vmatpush1.xpose.msra.mxu0 0.0
    %580 = vmatprep.subr.mxu0 0.0
    %581 = vmatpush1.xpose.msra.mxu0 0.0
    %582 = vmatprep.subr.mxu0 0.0
    %583 = vmatpush1.xpose.msra.mxu0 0.0
    %584 = vmatprep.subr.mxu0 0.0
    %585 = vmatpush1.xpose.msra.mxu0 0.0
    %586 = vmatprep.subr.mxu0 0.0
    %587 = vmatpush1.xpose.msra.mxu0 0.0
    %588 = vmatprep.subr.mxu0 0.0
    %589 = vmatpush1.xpose.msra.mxu0 0.0
    %590 = vmatprep.subr.mxu0 0.0
    %591 = vmatpush1.xpose.msra.mxu0 0.0
    %592 = vmatprep.subr.mxu0 0.0
    %593 = vmatpush1.xpose.msra.mxu0 0.0
    %594 = vmatprep.subr.mxu0 0.0
    %595 = vmatpush1.xpose.msra.mxu0 0.0
    %596 = vmatprep.subr.mxu0 0.0
    %597 = vmatpush1.xpose.msra.mxu0 0.0
    %598 = vmatprep.subr.mxu0 0.0
    %599 = vmatpush1.xpose.msra.mxu0 0.0
    %600 = vmatprep.subr.mxu0 0.0
    %601 = vmatpush1.xpose.msra.mxu0 0.0
    %602 = vmatprep.subr.mxu0 0.0
    %603 = vmatpush1.xpose.msra.mxu0 0.0
    %604 = vmatprep.subr.mxu0 0.0
    %605 = vmatpush1.xpose.msra.mxu0 0.0
    %606 = vmatprep.subr.mxu0 0.0
    %607 = vmatpush1.xpose.msra.mxu0 0.0
    %608 = vmatprep.subr.mxu0 0.0
    %609 = vmatpush1.xpose.msra.mxu0 0.0
    %610 = vmatprep.subr.mxu0 0.0
    %611 = vmatpush1.xpose.msra.mxu0 0.0
    %612 = vmatprep.subr.mxu0 0.0
    %613 = vmatpush1.xpose.msra.mxu0 0.0
    %614 = vmatprep.subr.mxu0 0.0
    %615 = vmatpush1.xpose.msra.mxu0 0.0
    %616 = vmatprep.mubr.f32.mxu0 0.0
    %617 = vmatmul.mubr.f32.gmra.mrb[0].mxu0 %v547
    %v618 = vpop.f32.mrb[0].mxu0
    %v619 = vadd.f32 0.0, %v618
    %v620 = vpop.f32.mrb[0].mxu0
    %621 = vdwg.mxu0
    %v623 = vsel %vm284, %v367, 0
    %v626 = vsel %vm284, %v457, 0
    %628 = vmatprep.subr.mxu0 0.0
    %629 = vmatpush1.xpose.msra.mxu0 %v626
    %630 = vmatprep.subr.mxu0 0.0
    %631 = vmatpush1.xpose.msra.mxu0 0.0
    %632 = vmatprep.subr.mxu0 0.0
    %633 = vmatpush1.xpose.msra.mxu0 0.0
    %634 = vmatprep.subr.mxu0 0.0
    %635 = vmatpush1.xpose.msra.mxu0 0.0
    %636 = vmatprep.subr.mxu0 0.0
    %637 = vmatpush1.xpose.msra.mxu0 0.0
    %638 = vmatprep.subr.mxu0 0.0
    %639 = vmatpush1.xpose.msra.mxu0 0.0
    %640 = vmatprep.subr.mxu0 0.0
    %641 = vmatpush1.xpose.msra.mxu0 0.0
    %642 = vmatprep.subr.mxu0 0.0
    %643 = vmatpush1.xpose.msra.mxu0 0.0
    %644 = vmatprep.subr.mxu0 0.0
    %645 = vmatpush1.xpose.msra.mxu0 0.0
    %646 = vmatprep.subr.mxu0 0.0
    %647 = vmatpush1.xpose.msra.mxu0 0.0
    %648 = vmatprep.subr.mxu0 0.0
    %649 = vmatpush1.xpose.msra.mxu0 0.0
    %650 = vmatprep.subr.mxu0 0.0
    %651 = vmatpush1.xpose.msra.mxu0 0.0
    %652 = vmatprep.subr.mxu0 0.0
    %653 = vmatpush1.xpose.msra.mxu0 0.0
    %654 = vmatprep.subr.mxu0 0.0
    %655 = vmatpush1.xpose.msra.mxu0 0.0
    %656 = vmatprep.subr.mxu0 0.0
    %657 = vmatpush1.xpose.msra.mxu0 0.0
    %658 = vmatprep.subr.mxu0 0.0
    %659 = vmatpush1.xpose.msra.mxu0 0.0
    %660 = vmatprep.subr.mxu0 0.0
    %661 = vmatpush1.xpose.msra.mxu0 0.0
    %662 = vmatprep.subr.mxu0 0.0
    %663 = vmatpush1.xpose.msra.mxu0 0.0
    %664 = vmatprep.subr.mxu0 0.0
    %665 = vmatpush1.xpose.msra.mxu0 0.0
    %666 = vmatprep.subr.mxu0 0.0
    %667 = vmatpush1.xpose.msra.mxu0 0.0
    %668 = vmatprep.subr.mxu0 0.0
    %669 = vmatpush1.xpose.msra.mxu0 0.0
    %670 = vmatprep.subr.mxu0 0.0
    %671 = vmatpush1.xpose.msra.mxu0 0.0
    %672 = vmatprep.subr.mxu0 0.0
    %673 = vmatpush1.xpose.msra.mxu0 0.0
    %674 = vmatprep.subr.mxu0 0.0
    %675 = vmatpush1.xpose.msra.mxu0 0.0
    %676 = vmatprep.subr.mxu0 0.0
    %677 = vmatpush1.xpose.msra.mxu0 0.0
    %678 = vmatprep.subr.mxu0 0.0
    %679 = vmatpush1.xpose.msra.mxu0 0.0
    %680 = vmatprep.subr.mxu0 0.0
    %681 = vmatpush1.xpose.msra.mxu0 0.0
    %682 = vmatprep.subr.mxu0 0.0
    %683 = vmatpush1.xpose.msra.mxu0 0.0
    %684 = vmatprep.subr.mxu0 0.0
    %685 = vmatpush1.xpose.msra.mxu0 0.0
    %686 = vmatprep.subr.mxu0 0.0
    %687 = vmatpush1.xpose.msra.mxu0 0.0
    %688 = vmatprep.subr.mxu0 0.0
    %689 = vmatpush1.xpose.msra.mxu0 0.0
    %690 = vmatprep.subr.mxu0 0.0
    %691 = vmatpush1.xpose.msra.mxu0 0.0
    %692 = vmatprep.mubr.f32.mxu0 0.0
    %693 = vmatmul.mubr.f32.gmra.mrb[0].mxu0 %v623
    %v694 = vpop.f32.mrb[0].mxu0
    %v695 = vadd.f32 0.0, %v694
    %v696 = vpop.f32.mrb[0].mxu0
    %697 = vdwg.mxu0
    %vm698 = vcmp.gt.f32.partialorder %v271, 0.5
    %vm699 = vcmp.gt.f32.partialorder %v272, 0.5
    %v700 = vsel %vm698, 1, 0
    %v701 = vsel %vm699, 1, 0
    %v702 = vlaneseq
    %v703 = vshrl.u32 %v702, 7
    %v704 = vsub.s32 0, %v703
    %v705 = vrot.slane %v700, %v704
    %v706 = vlaneseq
    %v707 = vshrl.u32 %v706, 7
    %v708 = vsub.s32 0, %v707
    %v709 = vrot.slane %v701, %v708
    %vm710 = vcmp.eq.s32.totalorder %v705, 1
    %vm711 = vcmp.eq.s32.totalorder %v709, 1
    %v712 = vsel %vm710, -1e+30, %v619
    %v713 = vsel %vm711, -1e+30, %v695
    %vm714 = vcmask 64512
    %v715 = vsel %vm714, %v712, -inf
    %716 = vmax.xlane.f32.xlu0 %v715
    %v717 = vpop.xlane.xlu0 %716
    %v718 = vsel %vm714, %v713, -inf
    %719 = vmax.xlane.f32.xlu0 %v718
    %v720 = vpop.xlane.xlu0 %719
    %v721 = vsub.f32 %v712, %v717
    %v722 = vsub.f32 %v713, %v720
    %v723 = vmul.f32 %v721, 1.442695
    %v724 = vpow.pop %v723
    %v725 = vmul.f32 %v722, 1.442695
    %v726 = vpow.pop %v725
    %v727 = vsel %vm714, %v724, 0.0
    %728 = vadd.xlane.f32.xlu0 %v727
    %v729 = vpop.xlane.xlu0 %728
    %v730 = vsel %vm714, %v726, 0.0
    %731 = vadd.xlane.f32.xlu0 %v730
    %v732 = vpop.xlane.xlu0 %731
    %v733 = vrcp.pop %v729
    %v734 = vrcp.pop %v732
    %v735 = vmul.f32 %v724, %v733
    %v736 = vmul.f32 %v726, %v734
    %v738 = vsel %vm714, %v735, 0
    %740 = vmatprep.subr.mxu0 0.0
    %741 = vmatpush1.msra.mxu0 %v538
    %742 = vmatprep.subr.mxu0 0.0
    %743 = vmatpush1.msra.mxu0 0.0
    %744 = vmatprep.subr.mxu0 0.0
    %745 = vmatpush1.msra.mxu0 0.0
    %746 = vmatprep.subr.mxu0 0.0
    %747 = vmatpush1.msra.mxu0 0.0
    %748 = vmatprep.subr.mxu0 0.0
    %749 = vmatpush1.msra.mxu0 0.0
    %750 = vmatprep.subr.mxu0 0.0
    %751 = vmatpush1.msra.mxu0 0.0
    %752 = vmatprep.subr.mxu0 0.0
    %753 = vmatpush1.msra.mxu0 0.0
    %754 = vmatprep.subr.mxu0 0.0
    %755 = vmatpush1.msra.mxu0 0.0
    %756 = vmatprep.subr.mxu0 0.0
    %757 = vmatpush1.msra.mxu0 0.0
    %758 = vmatprep.subr.mxu0 0.0
    %759 = vmatpush1.msra.mxu0 0.0
    %760 = vmatprep.subr.mxu0 0.0
    %761 = vmatpush1.msra.mxu0 0.0
    %762 = vmatprep.subr.mxu0 0.0
    %763 = vmatpush1.msra.mxu0 0.0
    %764 = vmatprep.subr.mxu0 0.0
    %765 = vmatpush1.msra.mxu0 0.0
    %766 = vmatprep.subr.mxu0 0.0
    %767 = vmatpush1.msra.mxu0 0.0
    %768 = vmatprep.subr.mxu0 0.0
    %769 = vmatpush1.msra.mxu0 0.0
    %770 = vmatprep.subr.mxu0 0.0
    %771 = vmatpush1.msra.mxu0 0.0
    %772 = vmatprep.subr.mxu0 0.0
    %773 = vmatpush1.msra.mxu0 0.0
    %774 = vmatprep.subr.mxu0 0.0
    %775 = vmatpush1.msra.mxu0 0.0
    %776 = vmatprep.subr.mxu0 0.0
    %777 = vmatpush1.msra.mxu0 0.0
    %778 = vmatprep.subr.mxu0 0.0
    %779 = vmatpush1.msra.mxu0 0.0
    %780 = vmatprep.subr.mxu0 0.0
    %781 = vmatpush1.msra.mxu0 0.0
    %782 = vmatprep.subr.mxu0 0.0
    %783 = vmatpush1.msra.mxu0 0.0
    %784 = vmatprep.subr.mxu0 0.0
    %785 = vmatpush1.msra.mxu0 0.0
    %786 = vmatprep.subr.mxu0 0.0
    %787 = vmatpush1.msra.mxu0 0.0
    %788 = vmatprep.subr.mxu0 0.0
    %789 = vmatpush1.msra.mxu0 0.0
    %790 = vmatprep.subr.mxu0 0.0
    %791 = vmatpush1.msra.mxu0 0.0
    %792 = vmatprep.subr.mxu0 0.0
    %793 = vmatpush1.msra.mxu0 0.0
    %794 = vmatprep.subr.mxu0 0.0
    %795 = vmatpush1.msra.mxu0 0.0
    %796 = vmatprep.subr.mxu0 0.0
    %797 = vmatpush1.msra.mxu0 0.0
    %798 = vmatprep.subr.mxu0 0.0
    %799 = vmatpush1.msra.mxu0 0.0
    %800 = vmatprep.subr.mxu0 0.0
    %801 = vmatpush1.msra.mxu0 0.0
    %802 = vmatprep.subr.mxu0 0.0
    %803 = vmatpush1.msra.mxu0 0.0
    %804 = vmatprep.mubr.f32.mxu0 0.0
    %805 = vmatmul.mubr.f32.gmra.mrb[0].mxu0 %v738
    %v806 = vpop.f32.mrb[0].mxu0
    %v807 = vadd.f32 0.0, %v806
    %v808 = vpop.f32.mrb[0].mxu0
    %809 = vdwg.mxu0
    %v811 = vsel %vm714, %v736, 0
    %813 = vmatprep.subr.mxu0 0.0
    %814 = vmatpush1.msra.mxu0 %v543
    %815 = vmatprep.subr.mxu0 0.0
    %816 = vmatpush1.msra.mxu0 0.0
    %817 = vmatprep.subr.mxu0 0.0
    %818 = vmatpush1.msra.mxu0 0.0
    %819 = vmatprep.subr.mxu0 0.0
    %820 = vmatpush1.msra.mxu0 0.0
    %821 = vmatprep.subr.mxu0 0.0
    %822 = vmatpush1.msra.mxu0 0.0
    %823 = vmatprep.subr.mxu0 0.0
    %824 = vmatpush1.msra.mxu0 0.0
    %825 = vmatprep.subr.mxu0 0.0
    %826 = vmatpush1.msra.mxu0 0.0
    %827 = vmatprep.subr.mxu0 0.0
    %828 = vmatpush1.msra.mxu0 0.0
    %829 = vmatprep.subr.mxu0 0.0
    %830 = vmatpush1.msra.mxu0 0.0
    %831 = vmatprep.subr.mxu0 0.0
    %832 = vmatpush1.msra.mxu0 0.0
    %833 = vmatprep.subr.mxu0 0.0
    %834 = vmatpush1.msra.mxu0 0.0
    %835 = vmatprep.subr.mxu0 0.0
    %836 = vmatpush1.msra.mxu0 0.0
    %837 = vmatprep.subr.mxu0 0.0
    %838 = vmatpush1.msra.mxu0 0.0
    %839 = vmatprep.subr.mxu0 0.0
    %840 = vmatpush1.msra.mxu0 0.0
    %841 = vmatprep.subr.mxu0 0.0
    %842 = vmatpush1.msra.mxu0 0.0
    %843 = vmatprep.subr.mxu0 0.0
    %844 = vmatpush1.msra.mxu0 0.0
    %845 = vmatprep.subr.mxu0 0.0
    %846 = vmatpush1.msra.mxu0 0.0
    %847 = vmatprep.subr.mxu0 0.0
    %848 = vmatpush1.msra.mxu0 0.0
    %849 = vmatprep.subr.mxu0 0.0
    %850 = vmatpush1.msra.mxu0 0.0
    %851 = vmatprep.subr.mxu0 0.0
    %852 = vmatpush1.msra.mxu0 0.0
    %853 = vmatprep.subr.mxu0 0.0
    %854 = vmatpush1.msra.mxu0 0.0
    %855 = vmatprep.subr.mxu0 0.0
    %856 = vmatpush1.msra.mxu0 0.0
    %857 = vmatprep.subr.mxu0 0.0
    %858 = vmatpush1.msra.mxu0 0.0
    %859 = vmatprep.subr.mxu0 0.0
    %860 = vmatpush1.msra.mxu0 0.0
    %861 = vmatprep.subr.mxu0 0.0
    %862 = vmatpush1.msra.mxu0 0.0
    %863 = vmatprep.subr.mxu0 0.0
    %864 = vmatpush1.msra.mxu0 0.0
    %865 = vmatprep.subr.mxu0 0.0
    %866 = vmatpush1.msra.mxu0 0.0
    %867 = vmatprep.subr.mxu0 0.0
    %868 = vmatpush1.msra.mxu0 0.0
    %869 = vmatprep.subr.mxu0 0.0
    %870 = vmatpush1.msra.mxu0 0.0
    %871 = vmatprep.subr.mxu0 0.0
    %872 = vmatpush1.msra.mxu0 0.0
    %873 = vmatprep.subr.mxu0 0.0
    %874 = vmatpush1.msra.mxu0 0.0
    %875 = vmatprep.subr.mxu0 0.0
    %876 = vmatpush1.msra.mxu0 0.0
    %877 = vmatprep.mubr.f32.mxu0 0.0
    %878 = vmatmul.mubr.f32.gmra.mrb[0].mxu0 %v811
    %v879 = vpop.f32.mrb[0].mxu0
    %v880 = vadd.f32 0.0, %v879
    %v881 = vpop.f32.mrb[0].mxu0
    %882 = vdwg.mxu0
    %v883 = vld [vmem:[#allocation17] sm:$0xff]
    %v884 = vld [vmem:[#allocation17 + $0x8] sm:$0xff]
    %v885 = vld [vmem:[#allocation17 + $0x10] sm:$0xff]
    %v886 = vld [vmem:[#allocation17 + $0x18] sm:$0xff]
    %v887 = vld [vmem:[#allocation19] sm:$0x1]
    %v889 = vlaneseq
    %v890 = vshrl.u32 %v889, 7
    %v891 = vsub.s32 0, %v890
    %v892 = vrot.slane %v887, %v891
    %v895 = vsel %vm284, %v807, 0
    %v898 = vsel %vm284, %v880, 0
    %900 = vmatprep.subr.mxu0 0.0
    %901 = vmatpush1.msra.mxu0 %v883
    %902 = vmatprep.subr.mxu0 0.0
    %903 = vmatpush1.msra.mxu0 %v884
    %904 = vmatprep.subr.mxu0 0.0
    %905 = vmatpush1.msra.mxu0 %v885
    %906 = vmatprep.subr.mxu0 0.0
    %907 = vmatpush1.msra.mxu0 %v886
    %908 = vmatprep.subr.mxu0 0.0
    %909 = vmatpush1.msra.mxu0 0.0
    %910 = vmatprep.subr.mxu0 0.0
    %911 = vmatpush1.msra.mxu0 0.0
    %912 = vmatprep.subr.mxu0 0.0
    %913 = vmatpush1.msra.mxu0 0.0
    %914 = vmatprep.subr.mxu0 0.0
    %915 = vmatpush1.msra.mxu0 0.0
    %916 = vmatprep.subr.mxu0 0.0
    %917 = vmatpush1.msra.mxu0 0.0
    %918 = vmatprep.subr.mxu0 0.0
    %919 = vmatpush1.msra.mxu0 0.0
    %920 = vmatprep.subr.mxu0 0.0
    %921 = vmatpush1.msra.mxu0 0.0
    %922 = vmatprep.subr.mxu0 0.0
    %923 = vmatpush1.msra.mxu0 0.0
    %924 = vmatprep.subr.mxu0 0.0
    %925 = vmatpush1.msra.mxu0 0.0
    %926 = vmatprep.subr.mxu0 0.0
    %927 = vmatpush1.msra.mxu0 0.0
    %928 = vmatprep.subr.mxu0 0.0
    %929 = vmatpush1.msra.mxu0 0.0
    %930 = vmatprep.subr.mxu0 0.0
    %931 = vmatpush1.msra.mxu0 0.0
    %932 = vmatprep.subr.mxu0 0.0
    %933 = vmatpush1.msra.mxu0 0.0
    %934 = vmatprep.subr.mxu0 0.0
    %935 = vmatpush1.msra.mxu0 0.0
    %936 = vmatprep.subr.mxu0 0.0
    %937 = vmatpush1.msra.mxu0 0.0
    %938 = vmatprep.subr.mxu0 0.0
    %939 = vmatpush1.msra.mxu0 0.0
    %940 = vmatprep.subr.mxu0 0.0
    %941 = vmatpush1.msra.mxu0 0.0
    %942 = vmatprep.subr.mxu0 0.0
    %943 = vmatpush1.msra.mxu0 0.0
    %944 = vmatprep.subr.mxu0 0.0
    %945 = vmatpush1.msra.mxu0 0.0
    %946 = vmatprep.subr.mxu0 0.0
    %947 = vmatpush1.msra.mxu0 0.0
    %948 = vmatprep.subr.mxu0 0.0
    %949 = vmatpush1.msra.mxu0 0.0
    %950 = vmatprep.subr.mxu0 0.0
    %951 = vmatpush1.msra.mxu0 0.0
    %952 = vmatprep.subr.mxu0 0.0
    %953 = vmatpush1.msra.mxu0 0.0
    %954 = vmatprep.subr.mxu0 0.0
    %955 = vmatpush1.msra.mxu0 0.0
    %956 = vmatprep.subr.mxu0 0.0
    %957 = vmatpush1.msra.mxu0 0.0
    %958 = vmatprep.subr.mxu0 0.0
    %959 = vmatpush1.msra.mxu0 0.0
    %960 = vmatprep.subr.mxu0 0.0
    %961 = vmatpush1.msra.mxu0 0.0
    %962 = vmatprep.subr.mxu0 0.0
    %963 = vmatpush1.msra.mxu0 0.0
    %964 = vmatprep.mubr.f32.mxu0 0.0
    %965 = vmatmul.mubr.f32.gmra.mrb[0].mxu0 %v895
    %v966 = vpop.f32.mrb[0].mxu0
    %v967 = vadd.f32 %v892, %v966
    %v968 = vpop.f32.mrb[0].mxu0
    %969 = vmatprep.mubr.f32.mxu0 0.0
    %970 = vmatmul.mubr.f32.gmra.mrb[0].mxu0 %v898
    %v971 = vpop.f32.mrb[0].mxu0
    %v972 = vadd.f32 %v892, %v971
    %v973 = vpop.f32.mrb[0].mxu0
    %974 = vdwg.mxu0
    %v975 = vadd.f32 %v267, %v967
    %v976 = vadd.f32 %v268, %v972
    %v977 = vld [vmem:[#allocation20] sm:$0x1]
    %v978 = vld [vmem:[#allocation22] sm:$0x1]
    %v979 = vsel %vm284, %v975, 0.0
    %980 = vadd.xlane.f32.xlu0 %v979
    %v981 = vpop.xlane.xlu0 %980
    %v982 = vsel %vm284, %v976, 0.0
    %983 = vadd.xlane.f32.xlu0 %v982
    %v984 = vpop.xlane.xlu0 %983
    %v985 = vrcp.pop 32.0
    %v986 = vmul.f32 %v981, %v985
    %v987 = vmul.f32 %v984, %v985
    %v988 = vsub.f32 %v975, %v986
    %v989 = vsub.f32 %v976, %v987
    %v990 = vmul.f32 %v988, %v988
    %v991 = vmul.f32 %v989, %v989
    %v992 = vsel %vm284, %v990, 0.0
    %993 = vadd.xlane.f32.xlu0 %v992
    %v994 = vpop.xlane.xlu0 %993
    %v995 = vsel %vm284, %v991, 0.0
    %996 = vadd.xlane.f32.xlu0 %v995
    %v997 = vpop.xlane.xlu0 %996
    %v998 = vmul.f32 %v994, %v985
    %v999 = vmul.f32 %v997, %v985
    %v1000 = vadd.f32 %v998, 1e-05
    %v1001 = vadd.f32 %v999, 1e-05
    %v1002 = vrsqrt.pop %v1000
    %v1003 = vrsqrt.pop %v1001
    %v1004 = vmul.f32 %v988, %v1002
    %v1005 = vmul.f32 %v989, %v1003
    %v1007 = vlaneseq
    %v1008 = vshrl.u32 %v1007, 7
    %v1009 = vsub.s32 0, %v1008
    %v1010 = vrot.slane %v977, %v1009
    %v1012 = vmul.f32 %v1004, %v1010
    %v1013 = vmul.f32 %v1005, %v1010
    %v1015 = vlaneseq
    %v1016 = vshrl.u32 %v1015, 7
    %v1017 = vsub.s32 0, %v1016
    %v1018 = vrot.slane %v978, %v1017
    %v1020 = vadd.f32 %v1012, %v1018
    %v1021 = vadd.f32 %v1013, %v1018
    %v1022 = vld [vmem:[%s17] sm:$0xff]
    %v1023 = vld [vmem:[%s17 + $0x8] sm:$0xff]
    %v1024 = vld [vmem:[%s17 + $0x10] sm:$0xff]
    %v1025 = vld [vmem:[%s17 + $0x18] sm:$0xff]
    %v1026 = vld [vmem:[%s18] sm:$0x1]
    %v1028 = vlaneseq
    %v1029 = vshrl.u32 %v1028, 7
    %v1030 = vsub.s32 0, %v1029
    %v1031 = vrot.slane %v1026, %v1030
    %v1034 = vsel %vm284, %v1020, 0
    %v1037 = vsel %vm284, %v1021, 0
    %1039 = vmatprep.subr.mxu0 0.0
    %1040 = vmatpush1.msra.mxu0 %v1022
    %1041 = vmatprep.subr.mxu0 0.0
    %1042 = vmatpush1.msra.mxu0 %v1023
    %1043 = vmatprep.subr.mxu0 0.0
    %1044 = vmatpush1.msra.mxu0 %v1024
    %1045 = vmatprep.subr.mxu0 0.0
    %1046 = vmatpush1.msra.mxu0 %v1025
    %1047 = vmatprep.subr.mxu0 0.0
    %1048 = vmatpush1.msra.mxu0 0.0
    %1049 = vmatprep.subr.mxu0 0.0
    %1050 = vmatpush1.msra.mxu0 0.0
    %1051 = vmatprep.subr.mxu0 0.0
    %1052 = vmatpush1.msra.mxu0 0.0
    %1053 = vmatprep.subr.mxu0 0.0
    %1054 = vmatpush1.msra.mxu0 0.0
    %1055 = vmatprep.subr.mxu0 0.0
    %1056 = vmatpush1.msra.mxu0 0.0
    %1057 = vmatprep.subr.mxu0 0.0
    %1058 = vmatpush1.msra.mxu0 0.0
    %1059 = vmatprep.subr.mxu0 0.0
    %1060 = vmatpush1.msra.mxu0 0.0
    %1061 = vmatprep.subr.mxu0 0.0
    %1062 = vmatpush1.msra.mxu0 0.0
    %1063 = vmatprep.subr.mxu0 0.0
    %1064 = vmatpush1.msra.mxu0 0.0
    %1065 = vmatprep.subr.mxu0 0.0
    %1066 = vmatpush1.msra.mxu0 0.0
    %1067 = vmatprep.subr.mxu0 0.0
    %1068 = vmatpush1.msra.mxu0 0.0
    %1069 = vmatprep.subr.mxu0 0.0
    %1070 = vmatpush1.msra.mxu0 0.0
    %1071 = vmatprep.subr.mxu0 0.0
    %1072 = vmatpush1.msra.mxu0 0.0
    %1073 = vmatprep.subr.mxu0 0.0
    %1074 = vmatpush1.msra.mxu0 0.0
    %1075 = vmatprep.subr.mxu0 0.0
    %1076 = vmatpush1.msra.mxu0 0.0
    %1077 = vmatprep.subr.mxu0 0.0
    %1078 = vmatpush1.msra.mxu0 0.0
    %1079 = vmatprep.subr.mxu0 0.0
    %1080 = vmatpush1.msra.mxu0 0.0
    %1081 = vmatprep.subr.mxu0 0.0
    %1082 = vmatpush1.msra.mxu0 0.0
    %1083 = vmatprep.subr.mxu0 0.0
    %1084 = vmatpush1.msra.mxu0 0.0
    %1085 = vmatprep.subr.mxu0 0.0
    %1086 = vmatpush1.msra.mxu0 0.0
    %1087 = vmatprep.subr.mxu0 0.0
    %1088 = vmatpush1.msra.mxu0 0.0
    %1089 = vmatprep.subr.mxu0 0.0
    %1090 = vmatpush1.msra.mxu0 0.0
    %1091 = vmatprep.subr.mxu0 0.0
    %1092 = vmatpush1.msra.mxu0 0.0
    %1093 = vmatprep.subr.mxu0 0.0
    %1094 = vmatpush1.msra.mxu0 0.0
    %1095 = vmatprep.subr.mxu0 0.0
    %1096 = vmatpush1.msra.mxu0 0.0
    %1097 = vmatprep.subr.mxu0 0.0
    %1098 = vmatpush1.msra.mxu0 0.0
    %1099 = vmatprep.subr.mxu0 0.0
    %1100 = vmatpush1.msra.mxu0 0.0
    %1101 = vmatprep.subr.mxu0 0.0
    %1102 = vmatpush1.msra.mxu0 0.0
    %1103 = vmatprep.mubr.f32.mxu0 0.0
    %1104 = vmatmul.mubr.f32.gmra.mrb[0].mxu0 %v1034
    %v1105 = vpop.f32.mrb[0].mxu0
    %v1106 = vadd.f32 %v1031, %v1105
    %v1107 = vpop.f32.mrb[0].mxu0
    %1108 = vmatprep.mubr.f32.mxu0 0.0
    %1109 = vmatmul.mubr.f32.gmra.mrb[0].mxu0 %v1037
    %v1110 = vpop.f32.mrb[0].mxu0
    %v1111 = vadd.f32 %v1031, %v1110
    %v1112 = vpop.f32.mrb[0].mxu0
    %1113 = vdwg.mxu0
    %v1114 = vmax.f32 %v1106, 0.0
    %v1115 = vmax.f32 %v1111, 0.0
    %v1116 = vld [vmem:[%s19] sm:$0xff]
    %v1117 = vld [vmem:[%s19 + $0x8] sm:$0xff]
    %v1118 = vld [vmem:[%s19 + $0x10] sm:$0xff]
    %v1119 = vld [vmem:[%s19 + $0x18] sm:$0xff]
    %v1120 = vld [vmem:[%s19 + $0x20] sm:$0xff]
    %v1121 = vld [vmem:[%s19 + $0x28] sm:$0xff]
    %v1122 = vld [vmem:[%s19 + $0x30] sm:$0xff]
    %v1123 = vld [vmem:[%s19 + $0x38] sm:$0xff]
    %v1124 = vld [vmem:[%s20] sm:$0x1]
    %v1126 = vlaneseq
    %v1127 = vshrl.u32 %v1126, 7
    %v1128 = vsub.s32 0, %v1127
    %v1129 = vrot.slane %v1124, %v1128
    %vm1131 = vcmask 523264
    %v1133 = vsel %vm1131, %v1114, 0
    %v1136 = vsel %vm1131, %v1115, 0
    %1138 = vmatprep.subr.mxu0 0.0
    %1139 = vmatpush1.msra.mxu0 %v1116
    %1140 = vmatprep.subr.mxu0 0.0
    %1141 = vmatpush1.msra.mxu0 %v1117
    %1142 = vmatprep.subr.mxu0 0.0
    %1143 = vmatpush1.msra.mxu0 %v1118
    %1144 = vmatprep.subr.mxu0 0.0
    %1145 = vmatpush1.msra.mxu0 %v1119
    %1146 = vmatprep.subr.mxu0 0.0
    %1147 = vmatpush1.msra.mxu0 %v1120
    %1148 = vmatprep.subr.mxu0 0.0
    %1149 = vmatpush1.msra.mxu0 %v1121
    %1150 = vmatprep.subr.mxu0 0.0
    %1151 = vmatpush1.msra.mxu0 %v1122
    %1152 = vmatprep.subr.mxu0 0.0
    %1153 = vmatpush1.msra.mxu0 %v1123
    %1154 = vmatprep.subr.mxu0 0.0
    %1155 = vmatpush1.msra.mxu0 0.0
    %1156 = vmatprep.subr.mxu0 0.0
    %1157 = vmatpush1.msra.mxu0 0.0
    %1158 = vmatprep.subr.mxu0 0.0
    %1159 = vmatpush1.msra.mxu0 0.0
    %1160 = vmatprep.subr.mxu0 0.0
    %1161 = vmatpush1.msra.mxu0 0.0
    %1162 = vmatprep.subr.mxu0 0.0
    %1163 = vmatpush1.msra.mxu0 0.0
    %1164 = vmatprep.subr.mxu0 0.0
    %1165 = vmatpush1.msra.mxu0 0.0
    %1166 = vmatprep.subr.mxu0 0.0
    %1167 = vmatpush1.msra.mxu0 0.0
    %1168 = vmatprep.subr.mxu0 0.0
    %1169 = vmatpush1.msra.mxu0 0.0
    %1170 = vmatprep.subr.mxu0 0.0
    %1171 = vmatpush1.msra.mxu0 0.0
    %1172 = vmatprep.subr.mxu0 0.0
    %1173 = vmatpush1.msra.mxu0 0.0
    %1174 = vmatprep.subr.mxu0 0.0
    %1175 = vmatpush1.msra.mxu0 0.0
    %1176 = vmatprep.subr.mxu0 0.0
    %1177 = vmatpush1.msra.mxu0 0.0
    %1178 = vmatprep.subr.mxu0 0.0
    %1179 = vmatpush1.msra.mxu0 0.0
    %1180 = vmatprep.subr.mxu0 0.0
    %1181 = vmatpush1.msra.mxu0 0.0
    %1182 = vmatprep.subr.mxu0 0.0
    %1183 = vmatpush1.msra.mxu0 0.0
    %1184 = vmatprep.subr.mxu0 0.0
    %1185 = vmatpush1.msra.mxu0 0.0
    %1186 = vmatprep.subr.mxu0 0.0
    %1187 = vmatpush1.msra.mxu0 0.0
    %1188 = vmatprep.subr.mxu0 0.0
    %1189 = vmatpush1.msra.mxu0 0.0
    %1190 = vmatprep.subr.mxu0 0.0
    %1191 = vmatpush1.msra.mxu0 0.0
    %1192 = vmatprep.subr.mxu0 0.0
    %1193 = vmatpush1.msra.mxu0 0.0
    %1194 = vmatprep.subr.mxu0 0.0
    %1195 = vmatpush1.msra.mxu0 0.0
    %1196 = vmatprep.subr.mxu0 0.0
    %1197 = vmatpush1.msra.mxu0 0.0
    %1198 = vmatprep.subr.mxu0 0.0
    %1199 = vmatpush1.msra.mxu0 0.0
    %1200 = vmatprep.subr.mxu0 0.0
    %1201 = vmatpush1.msra.mxu0 0.0
    %1202 = vmatprep.mubr.f32.mxu0 0.0
    %1203 = vmatmul.mubr.f32.gmra.mrb[0].mxu0 %v1133
    %v1204 = vpop.f32.mrb[0].mxu0
    %v1205 = vadd.f32 %v1129, %v1204
    %v1206 = vpop.f32.mrb[0].mxu0
    %1207 = vmatprep.mubr.f32.mxu0 0.0
    %1208 = vmatmul.mubr.f32.gmra.mrb[0].mxu0 %v1136
    %v1209 = vpop.f32.mrb[0].mxu0
    %v1210 = vadd.f32 %v1129, %v1209
    %v1211 = vpop.f32.mrb[0].mxu0
    %1212 = vdwg.mxu0
    %v1213 = vadd.f32 %v1020, %v1205
    %v1214 = vadd.f32 %v1021, %v1210
    %v1215 = vld [vmem:[%s21] sm:$0x1]
    %v1216 = vld [vmem:[%s22] sm:$0x1]
    %v1217 = vsel %vm284, %v1213, 0.0
    %1218 = vadd.xlane.f32.xlu0 %v1217
    %v1219 = vpop.xlane.xlu0 %1218
    %v1220 = vsel %vm284, %v1214, 0.0
    %1221 = vadd.xlane.f32.xlu0 %v1220
    %v1222 = vpop.xlane.xlu0 %1221
    %v1223 = vmul.f32 %v1219, %v985
    %v1224 = vmul.f32 %v1222, %v985
    %v1225 = vsub.f32 %v1213, %v1223
    %v1226 = vsub.f32 %v1214, %v1224
    %v1227 = vmul.f32 %v1225, %v1225
    %v1228 = vmul.f32 %v1226, %v1226
    %v1229 = vsel %vm284, %v1227, 0.0
    %1230 = vadd.xlane.f32.xlu0 %v1229
    %v1231 = vpop.xlane.xlu0 %1230
    %v1232 = vsel %vm284, %v1228, 0.0
    %1233 = vadd.xlane.f32.xlu0 %v1232
    %v1234 = vpop.xlane.xlu0 %1233
    %v1235 = vmul.f32 %v1231, %v985
    %v1236 = vmul.f32 %v1234, %v985
    %v1237 = vadd.f32 %v1235, 1e-05
    %v1238 = vadd.f32 %v1236, 1e-05
    %v1239 = vrsqrt.pop %v1237
    %v1240 = vrsqrt.pop %v1238
    %v1241 = vmul.f32 %v1225, %v1239
    %v1242 = vmul.f32 %v1226, %v1240
    %v1244 = vlaneseq
    %v1245 = vshrl.u32 %v1244, 7
    %v1246 = vsub.s32 0, %v1245
    %v1247 = vrot.slane %v1215, %v1246
    %v1249 = vmul.f32 %v1241, %v1247
    %v1250 = vmul.f32 %v1242, %v1247
    %v1252 = vlaneseq
    %v1253 = vshrl.u32 %v1252, 7
    %v1254 = vsub.s32 0, %v1253
    %v1255 = vrot.slane %v1216, %v1254
    %v1257 = vadd.f32 %v1249, %v1255
    %v1258 = vadd.f32 %v1250, %v1255
    %1259 = vst.msk [vmem:[#allocation25] sm:$0xff] %vm284, %v1257
    %1260 = vst.msk [vmem:[#allocation25 + $0x8] sm:$0xff] %vm284, %v1258
    %v1261 = vld [vmem:[#allocation23] sm:$0xff]
    %v1262 = vld [vmem:[#allocation23 + $0x8] sm:$0xff]
    %v1263 = vld [vmem:[#allocation23 + $0x10] sm:$0xff]
    %v1264 = vld [vmem:[#allocation23 + $0x18] sm:$0xff]
    %v1265 = vld [vmem:[%s24] sm:$0x1]
    %v1267 = vlaneseq
    %v1268 = vshrl.u32 %v1267, 7
    %v1269 = vsub.s32 0, %v1268
    %v1270 = vrot.slane %v1265, %v1269
    %v1273 = vsel %vm284, %v1257, 0
    %v1276 = vsel %vm284, %v1258, 0
    %1278 = vmatprep.subr.mxu0 0.0
    %1279 = vmatpush1.msra.mxu0 %v1261
    %1280 = vmatprep.subr.mxu0 0.0
    %1281 = vmatpush1.msra.mxu0 %v1262
    %1282 = vmatprep.subr.mxu0 0.0
    %1283 = vmatpush1.msra.mxu0 %v1263
    %1284 = vmatprep.subr.mxu0 0.0
    %1285 = vmatpush1.msra.mxu0 %v1264
    %1286 = vmatprep.subr.mxu0 0.0
    %1287 = vmatpush1.msra.mxu0 0.0
    %1288 = vmatprep.subr.mxu0 0.0
    %1289 = vmatpush1.msra.mxu0 0.0
    %1290 = vmatprep.subr.mxu0 0.0
    %1291 = vmatpush1.msra.mxu0 0.0
    %1292 = vmatprep.subr.mxu0 0.0
    %1293 = vmatpush1.msra.mxu0 0.0
    %1294 = vmatprep.subr.mxu0 0.0
    %1295 = vmatpush1.msra.mxu0 0.0
    %1296 = vmatprep.subr.mxu0 0.0
    %1297 = vmatpush1.msra.mxu0 0.0
    %1298 = vmatprep.subr.mxu0 0.0
    %1299 = vmatpush1.msra.mxu0 0.0
    %1300 = vmatprep.subr.mxu0 0.0
    %1301 = vmatpush1.msra.mxu0 0.0
    %1302 = vmatprep.subr.mxu0 0.0
    %1303 = vmatpush1.msra.mxu0 0.0
    %1304 = vmatprep.subr.mxu0 0.0
    %1305 = vmatpush1.msra.mxu0 0.0
    %1306 = vmatprep.subr.mxu0 0.0
    %1307 = vmatpush1.msra.mxu0 0.0
    %1308 = vmatprep.subr.mxu0 0.0
    %1309 = vmatpush1.msra.mxu0 0.0
    %1310 = vmatprep.subr.mxu0 0.0
    %1311 = vmatpush1.msra.mxu0 0.0
    %1312 = vmatprep.subr.mxu0 0.0
    %1313 = vmatpush1.msra.mxu0 0.0
    %1314 = vmatprep.subr.mxu0 0.0
    %1315 = vmatpush1.msra.mxu0 0.0
    %1316 = vmatprep.subr.mxu0 0.0
    %1317 = vmatpush1.msra.mxu0 0.0
    %1318 = vmatprep.subr.mxu0 0.0
    %1319 = vmatpush1.msra.mxu0 0.0
    %1320 = vmatprep.subr.mxu0 0.0
    %1321 = vmatpush1.msra.mxu0 0.0
    %1322 = vmatprep.subr.mxu0 0.0
    %1323 = vmatpush1.msra.mxu0 0.0
    %1324 = vmatprep.subr.mxu0 0.0
    %1325 = vmatpush1.msra.mxu0 0.0
    %1326 = vmatprep.subr.mxu0 0.0
    %1327 = vmatpush1.msra.mxu0 0.0
    %1328 = vmatprep.subr.mxu0 0.0
    %1329 = vmatpush1.msra.mxu0 0.0
    %1330 = vmatprep.subr.mxu0 0.0
    %1331 = vmatpush1.msra.mxu0 0.0
    %1332 = vmatprep.subr.mxu0 0.0
    %1333 = vmatpush1.msra.mxu0 0.0
    %1334 = vmatprep.subr.mxu0 0.0
    %1335 = vmatpush1.msra.mxu0 0.0
    %1336 = vmatprep.subr.mxu0 0.0
    %1337 = vmatpush1.msra.mxu0 0.0
    %1338 = vmatprep.subr.mxu0 0.0
    %1339 = vmatpush1.msra.mxu0 0.0
    %1340 = vmatprep.subr.mxu0 0.0
    %1341 = vmatpush1.msra.mxu0 0.0
    %1342 = vmatprep.mubr.f32.mxu0 0.0
    %1343 = vmatmul.mubr.f32.gmra.mrb[0].mxu0 %v1273
    %v1344 = vpop.f32.mrb[0].mxu0
    %v1345 = vadd.f32 %v1270, %v1344
    %v1346 = vpop.f32.mrb[0].mxu0
    %1347 = vmatprep.mubr.f32.mxu0 0.0
    %1348 = vmatmul.mubr.f32.gmra.mrb[0].mxu0 %v1276
    %v1349 = vpop.f32.mrb[0].mxu0
    %v1350 = vadd.f32 %v1270, %v1349
    %v1351 = vpop.f32.mrb[0].mxu0
    %1352 = vdwg.mxu0
    %v1353 = vtanh.pop %v1345
    %v1354 = vtanh.pop %v1350
    %v1355 = vld [vmem:[%s25] sm:$0xff]
    %v1356 = vld [vmem:[%s25 + $0x8] sm:$0xff]
    %v1357 = vld [vmem:[%s25 + $0x10] sm:$0xff]
    %v1358 = vld [vmem:[%s25 + $0x18] sm:$0xff]
    %v1359 = vld [vmem:[%s25 + $0x20] sm:$0xff]
    %v1360 = vld [vmem:[%s25 + $0x28] sm:$0xff]
    %v1361 = vld [vmem:[%s25 + $0x30] sm:$0xff]
    %v1362 = vld [vmem:[%s25 + $0x38] sm:$0xff]
    %v1363 = vld [vmem:[%s26] sm:$0x3]
    %v1365 = vlaneseq
    %v1366 = vshrl.u32 %v1365, 7
    %v1367 = vsub.s32 0, %v1366
    %v1368 = vrot.slane %v1363, %v1367
    %v1369 = vlaneseq
    %v1370 = vshrl.u32 %v1369, 7
    %v1371 = vsub.s32 1, %v1370
    %v1372 = vrot.slane %v1363, %v1371
    %v1376 = vsel %vm284, %v1353, 0
    %v1379 = vsel %vm284, %v1354, 0
    %1381 = vmatprep.subr.mxu0 %v1356
    %1382 = vmatpush1.msra.mxu0 %v1355
    %1383 = vmatprep.subr.mxu0 %v1358
    %1384 = vmatpush1.msra.mxu0 %v1357
    %1385 = vmatprep.subr.mxu0 %v1360
    %1386 = vmatpush1.msra.mxu0 %v1359
    %1387 = vmatprep.subr.mxu0 %v1362
    %1388 = vmatpush1.msra.mxu0 %v1361
    %1389 = vmatprep.subr.mxu0 0.0
    %1390 = vmatpush1.msra.mxu0 0.0
    %1391 = vmatprep.subr.mxu0 0.0
    %1392 = vmatpush1.msra.mxu0 0.0
    %1393 = vmatprep.subr.mxu0 0.0
    %1394 = vmatpush1.msra.mxu0 0.0
    %1395 = vmatprep.subr.mxu0 0.0
    %1396 = vmatpush1.msra.mxu0 0.0
    %1397 = vmatprep.subr.mxu0 0.0
    %1398 = vmatpush1.msra.mxu0 0.0
    %1399 = vmatprep.subr.mxu0 0.0
    %1400 = vmatpush1.msra.mxu0 0.0
    %1401 = vmatprep.subr.mxu0 0.0
    %1402 = vmatpush1.msra.mxu0 0.0
    %1403 = vmatprep.subr.mxu0 0.0
    %1404 = vmatpush1.msra.mxu0 0.0
    %1405 = vmatprep.subr.mxu0 0.0
    %1406 = vmatpush1.msra.mxu0 0.0
    %1407 = vmatprep.subr.mxu0 0.0
    %1408 = vmatpush1.msra.mxu0 0.0
    %1409 = vmatprep.subr.mxu0 0.0
    %1410 = vmatpush1.msra.mxu0 0.0
    %1411 = vmatprep.subr.mxu0 0.0
    %1412 = vmatpush1.msra.mxu0 0.0
    %1413 = vmatprep.subr.mxu0 0.0
    %1414 = vmatpush1.msra.mxu0 0.0
    %1415 = vmatprep.subr.mxu0 0.0
    %1416 = vmatpush1.msra.mxu0 0.0
    %1417 = vmatprep.subr.mxu0 0.0
    %1418 = vmatpush1.msra.mxu0 0.0
    %1419 = vmatprep.subr.mxu0 0.0
    %1420 = vmatpush1.msra.mxu0 0.0
    %1421 = vmatprep.subr.mxu0 0.0
    %1422 = vmatpush1.msra.mxu0 0.0
    %1423 = vmatprep.subr.mxu0 0.0
    %1424 = vmatpush1.msra.mxu0 0.0
    %1425 = vmatprep.subr.mxu0 0.0
    %1426 = vmatpush1.msra.mxu0 0.0
    %1427 = vmatprep.subr.mxu0 0.0
    %1428 = vmatpush1.msra.mxu0 0.0
    %1429 = vmatprep.subr.mxu0 0.0
    %1430 = vmatpush1.msra.mxu0 0.0
    %1431 = vmatprep.subr.mxu0 0.0
    %1432 = vmatpush1.msra.mxu0 0.0
    %1433 = vmatprep.subr.mxu0 0.0
    %1434 = vmatpush1.msra.mxu0 0.0
    %1435 = vmatprep.subr.mxu0 0.0
    %1436 = vmatpush1.msra.mxu0 0.0
    %1437 = vmatprep.subr.mxu0 0.0
    %1438 = vmatpush1.msra.mxu0 0.0
    %1439 = vmatprep.subr.mxu0 0.0
    %1440 = vmatpush1.msra.mxu0 0.0
    %1441 = vmatprep.subr.mxu0 0.0
    %1442 = vmatpush1.msra.mxu0 0.0
    %1443 = vmatprep.subr.mxu0 0.0
    %1444 = vmatpush1.msra.mxu0 0.0
    %1445 = vmatprep.mubr.f32.mxu0 0.0
    %1446 = vmatmul.mubr.f32.gmra.mrb[0].mxu0 %v1376
    %v1447 = vpop.f32.mrb[0].mxu0
    %v1448 = vadd.f32 %v1368, %v1447
    %v1449 = vpop.f32.mrb[0].mxu0
    %v1450 = vadd.f32 %v1372, %v1449
    %1451 = vmatprep.mubr.f32.mxu0 0.0
    %1452 = vmatmul.mubr.f32.gmra.mrb[0].mxu0 %v1379
    %v1453 = vpop.f32.mrb[0].mxu0
    %v1454 = vadd.f32 %v1368, %v1453
    %v1455 = vpop.f32.mrb[0].mxu0
    %v1456 = vadd.f32 %v1372, %v1455
    %1457 = vdwg.mxu0
    %1458 = vmax.xlane.f32.xlu0 %v1450
    %v1459 = vpop.xlane.xlu0 %1458
    %1460 = vmax.xlane.f32.xlu0 %v1456
    %v1461 = vpop.xlane.xlu0 %1460
    %v1462 = vsub.f32 %v1450, %v1459
    %v1463 = vsub.f32 %v1456, %v1461
    %v1464 = vmul.f32 %v1462, 1.442695
    %v1465 = vpow.pop %v1464
    %v1466 = vmul.f32 %v1463, 1.442695
    %v1467 = vpow.pop %v1466
    %1468 = vadd.xlane.f32.xlu0 %v1465
    %v1469 = vpop.xlane.xlu0 %1468
    %1470 = vadd.xlane.f32.xlu0 %v1467
    %v1471 = vpop.xlane.xlu0 %1470
    %v1472 = vrcp.pop %v1469
    %v1473 = vrcp.pop %v1471
    %v1474 = vmul.f32 %v1465, %v1472
    %v1475 = vmul.f32 %v1467, %v1473
    %1476 = vmax.xlane.f32.xlu0 %v1448
    %v1477 = vpop.xlane.xlu0 %1476
    %1478 = vmax.xlane.f32.xlu0 %v1454
    %v1479 = vpop.xlane.xlu0 %1478
    %v1480 = vsub.f32 %v1448, %v1477
    %v1481 = vsub.f32 %v1454, %v1479
    %v1482 = vmul.f32 %v1480, 1.442695
    %v1483 = vpow.pop %v1482
    %v1484 = vmul.f32 %v1481, 1.442695
    %v1485 = vpow.pop %v1484
    %1486 = vadd.xlane.f32.xlu0 %v1483
    %v1487 = vpop.xlane.xlu0 %1486
    %1488 = vadd.xlane.f32.xlu0 %v1485
    %v1489 = vpop.xlane.xlu0 %1488
    %v1490 = vrcp.pop %v1487
    %v1491 = vrcp.pop %v1489
    %v1492 = vld [vmem:[#allocation10] sm:$0xff]
    %v1493 = vld [vmem:[#allocation10 + $0x8] sm:$0xff]
    %v1494 = vmul.f32 %v1353, %v1492
    %v1495 = vmul.f32 %v1354, %v1493
    %v1496 = vsel %vm284, %v1494, 0.0
    %1497 = vadd.xlane.f32.xlu0 %v1496
    %v1498 = vpop.xlane.xlu0 %1497
    %v1499 = vsel %vm284, %v1495, 0.0
    %1500 = vadd.xlane.f32.xlu0 %v1499
    %v1501 = vpop.xlane.xlu0 %1500
    %v1502 = vld [vmem:[%s6] sm:$0xff]
    %v1503 = vld [vmem:[%s6 + $0x8] sm:$0xff]
    %v1504 = vadd.f32 %v1498, %v1502
    %v1505 = vadd.f32 %v1501, %v1503
    %v1506 = vsub.f32 %v1504, %v1477
    %v1507 = vsub.f32 %v1505, %v1479
    %v1508 = vmul.f32 %v1506, 1.442695
    %v1509 = vpow.pop %v1508
    %v1510 = vmul.f32 %v1507, 1.442695
    %v1511 = vpow.pop %v1510
    %v1512 = vmul.f32 %v1474, %v1509
    %v1513 = vmul.f32 %v1475, %v1511
    %v1514 = vmul.f32 %v1512, %v1490
    %v1515 = vmul.f32 %v1513, %v1491
    %v1516 = vld [vmem:[#allocation8] sm:$0x3]
    %v1517 = vld [vmem:[#allocation8 + $0x2] sm:$0x3]
    %v1518 = vld [vmem:[%s4] sm:$0xff]
    %v1519 = vld [vmem:[%s4 + $0x8] sm:$0xff]
    %v1520 = vlaneseq
    %v1521 = vshrl.u32 %v1520, 7
    %v1522 = vsub.s32 0, %v1521
    %v1523 = vrot.slane %v1516, %v1522
    %v1524 = vlaneseq
    %v1525 = vshrl.u32 %v1524, 7
    %v1526 = vsub.s32 0, %v1525
    %v1527 = vrot.slane %v1517, %v1526
    %1528 = vset.pattern.permute.xlu0 0
    %1529 = vperm.xlu0 %1528, %v1518
    %v1530 = vpop.permute.xlu0 %1529
    %1531 = vset.pattern.permute.xlu0 0
    %1532 = vperm.xlu0 %1531, %v1519
    %v1533 = vpop.permute.xlu0 %1532
    %vm1534 = vcmp.eq.s32.totalorder %v1523, %v1530
    %vm1535 = vcmp.eq.s32.totalorder %v1527, %v1533
    %v1536 = vsel %vm1534, 1, 0
    %v1537 = vsel %vm1535, 1, 0
    %v1538 = vcvt.s32.f32 %v1536
    %v1539 = vcvt.s32.f32 %v1537
    %v1540 = vlaneseq
    %v1541 = vshrl.u32 %v1540, 7
    %v1542 = vsub.s32 1, %v1541
    %v1543 = vrot.slane %v1516, %v1542
    %v1544 = vlaneseq
    %v1545 = vshrl.u32 %v1544, 7
    %v1546 = vsub.s32 1, %v1545
    %v1547 = vrot.slane %v1517, %v1546
    %vm1548 = vcmp.eq.s32.totalorder %v1543, %v1530
    %vm1549 = vcmp.eq.s32.totalorder %v1547, %v1533
    %v1550 = vsel %vm1548, 1, 0
    %v1551 = vsel %vm1549, 1, 0
    %v1552 = vcvt.s32.f32 %v1550
    %v1553 = vcvt.s32.f32 %v1551
    %v1554 = vmul.f32 %v735, %v1538
    %v1555 = vmul.f32 %v736, %v1539
    %v1556 = vsel %vm714, %v1554, 0.0
    %1557 = vadd.xlane.f32.xlu0 %v1556
    %v1558 = vpop.xlane.xlu0 %1557
    %v1559 = vsel %vm714, %v1555, 0.0
    %1560 = vadd.xlane.f32.xlu0 %v1559
    %v1561 = vpop.xlane.xlu0 %1560
    %v1562 = vmul.f32 %v1474, %v1558
    %v1563 = vmul.f32 %v1475, %v1561
    %v1564 = vmul.f32 %v735, %v1552
    %v1565 = vmul.f32 %v736, %v1553
    %v1566 = vsel %vm714, %v1564, 0.0
    %1567 = vadd.xlane.f32.xlu0 %v1566
    %v1568 = vpop.xlane.xlu0 %1567
    %v1569 = vsel %vm714, %v1565, 0.0
    %1570 = vadd.xlane.f32.xlu0 %v1569
    %v1571 = vpop.xlane.xlu0 %1570
    %v1572 = vmul.f32 %v1474, %v1568
    %v1573 = vmul.f32 %v1475, %v1571
    %1576 = vrot.lane.b32.xlu0 %v1572, 1
    %v1577 = vpop.permute.xlu0 %1576
    %1578 = vrot.lane.b32.xlu0 %v1573, 1
    %v1579 = vpop.permute.xlu0 %1578
    %v1582 = vadd.f32 %v1562, %v1577
    %v1583 = vadd.f32 %v1563, %v1579
    %1586 = vrot.lane.b32.xlu0 %v1582, 126
    %v1587 = vpop.permute.xlu0 %1586
    %1588 = vrot.lane.b32.xlu0 %v1583, 126
    %v1589 = vpop.permute.xlu0 %1588
    %v1592 = vadd.f32 %v1514, %v1587
    %v1593 = vadd.f32 %v1515, %v1589
    %vm1594 = vcmp.ne.s32.totalorder %v1518, 0
    %vm1595 = vcmp.ne.s32.totalorder %v1519, 0
    %v1596 = vsel %vm1594, 1, 0
    %v1597 = vsel %vm1595, 1, 0
    %v1598 = vcvt.s32.f32 %v1596
    %v1599 = vcvt.s32.f32 %v1597
    %v1600 = vadd.f32 %v1592, 1e-12
    %v1601 = vadd.f32 %v1593, 1e-12
    %v1602 = vlog2.pop %v1600
    %v1603 = vmul.f32 %v1602, 0.6931472
    %v1604 = vlog2.pop %v1601
    %v1605 = vmul.f32 %v1604, 0.6931472
    %v1606 = vsub.f32 0.0, %v1603
    %v1607 = vsub.f32 0.0, %v1605
    %v1608 = vmul.f32 %v1606, %v1598
    %v1609 = vmul.f32 %v1607, %v1599
    %vm1610 = vcmask 7168
    %v1611 = vsel %vm1610, %v1608, 0.0
    %v1612 = vrot.slane %v1611, 4
    %v1613 = vadd.f32 %v1611, %v1612
    %v1614 = vrot.slane %v1613, 2
    %v1615 = vadd.f32 %v1613, %v1614
    %v1616 = vrot.slane %v1615, 1
    %v1617 = vadd.f32 %v1615, %v1616
    %v1618 = vsel %vm1610, %v1609, 0.0
    %v1619 = vrot.slane %v1618, 4
    %v1620 = vadd.f32 %v1618, %v1619
    %v1621 = vrot.slane %v1620, 2
    %v1622 = vadd.f32 %v1620, %v1621
    %v1623 = vrot.slane %v1622, 1
    %v1624 = vadd.f32 %v1622, %v1623
    %vm1625 = vcmask 0
    %1626 = vst.msk [vmem:[%s28] sm:$0x1] %vm1625, %v1617
    %1627 = vst.msk [vmem:[%s28 + $0x1] sm:$0x1] %vm1625, %v1624
    // Predicated region
    $region166: #{tpu_custom_call.1} parent=1 // pred_check
      _
    $region167: #{tpu_custom_call.1} parent=1 // pred_check_branch
      %1629 = sbr.rel (0) target = $region169
    $region168: #{tpu_custom_call.1} parent=1 // pred_region
      %s1631 = ssub.s32 256, 256
      %1632 = vsyncadd [#allocation4], %s1631
      %s1633 = sshll.u32 [#allocation25], 4
      %s1634 = int_to_ptr.vmem [resolvable:$true] %s1633
      %1639 = dma.vmem_to_hbm [thread:$0]  %s1634, 256, %s27, [#allocation4], 128, 128, 8
    $region169: #{tpu_custom_call.1} parent=1 // pred_fallthru
      _
    // Predicated region
    $region170: #{tpu_custom_call.1} parent=1 // pred_check
      _
    $region171: #{tpu_custom_call.1} parent=1 // pred_check_branch
      %1641 = sbr.rel (0) target = $region173
    $region172: #{tpu_custom_call.1} parent=1 // pred_region
      _
    $region173: #{tpu_custom_call.1} parent=1 // pred_fallthru
      _
    // Predicated region
    $region174: #{tpu_custom_call.1} parent=1 // pred_check
      _
    $region175: #{tpu_custom_call.1} parent=1 // pred_check_branch
      %1643 = sbr.rel (0) target = $region177
    $region176: #{tpu_custom_call.1} parent=1 // pred_region
      %1644 = dma.done [#allocation4], 256
    $region177: #{tpu_custom_call.1} parent=1 // pred_fallthru
      _
    // Predicated region
    $region178: #{tpu_custom_call.1} parent=1 // pred_check
      _
    $region179: #{tpu_custom_call.1} parent=1 // pred_check_branch
      %1646 = sbr.rel (0) target = $region181
    $region180: #{tpu_custom_call.1} parent=1 // pred_region
      _
    $region181: #{tpu_custom_call.1} parent=1 // pred_fallthru
      _
    %1647 = vsyncpa [#allocation3], 1
    %1648 = vsyncpa [#allocation6], 1
    %1649 = vsyncpa [#allocation9], 1
    %1650 = vsyncpa [#allocation12], 1
    %1651 = vsyncpa [#allocation15], 1
    %1652 = vsyncpa [#allocation18], 1
    %1653 = vsyncpa [#allocation21], 1
    %1654 = vsyncpa [#allocation24], 1
    %1655 = vsyncpa [#allocation4], 1

</llo_original>
